<compile_context>
chip_gen: v5e
topology: v5e:2x2
jax: 0.10.0
libtpu: 0.0.40
codegen_flags: <defaults>
</compile_context>

<pallas_src>
import jax
import jax.numpy as jnp
from jax import lax
from jax.experimental import pallas as pl
from jax.experimental.pallas import tpu as pltpu


def _hsig(v):
    # h_sigmoid(x) = relu6(x + 3) / 6
    return jnp.clip(v + 3.0, 0.0, 6.0) * (1.0 / 6.0)


def _act(v, use_hs):
    # h_swish(x) = x * h_sigmoid(x)  /  ReLU
    return v * _hsig(v) if use_hs else jnp.maximum(v, 0.0)


def _round_up(x, m):
    return (x + m - 1) // m * m


# --------------------------------------------------------------------------------------
# Fused MobileNet block kernel (Bblk images packed along the lane/channel axis)
# --------------------------------------------------------------------------------------
def _make_block_kernel(*, H, W, Cin, hidden, oup, KH, KW, stride, P, PADL, Bblk,
                       MSP, has_expand, use_se, use_hs, identity, mdt):
    Ho = (H + 2 * P - KH) // stride + 1
    Wo = (W + 2 * P - KW) // stride + 1
    HW, HoWo = H * W, Ho * Wo
    C = Bblk * hidden          # lane-packed channel dim of the hidden activations
    BC = Bblk * Cin            # lane-packed channel dim of x
    Wbuf = PADL + W + P
    Hbuf = H + 2 * P
    col0 = PADL - P
    f32 = jnp.float32

    def kernel(*refs):
        it = iter(refs)
        x_ref = next(it)                              # (1, HW, BC)        f32
        if has_expand:
            w1_ref, b1_ref = next(it), next(it)       # (BC, C) mdt, (1, C) f32
        wdw_ref, b2_ref = next(it), next(it)          # (KH*KW, C) f32, (1, C) f32
        if use_se:
            wse1_ref, bse1_ref = next(it), next(it)   # (C, B*hse) mdt, (1, B*hse) f32
            wse2_ref, bse2_ref = next(it), next(it)   # (B*hse, C) mdt, (1, C) f32
        w3t_ref, b3_ref = next(it), next(it)          # (B*oup, C) mdt, (B*oup, 1) f32
        if identity:
            eye_ref = next(it)                        # (B*oup, BC) mdt identity
        o_ref = next(it)                              # (1, B*oup, MSP)
        padbuf = next(it)                             # (Hbuf, Wbuf, C) f32 scratch

        x2 = x_ref[0]                                 # (HW, BC) f32

        # ---- 1x1 expand conv (BN folded) as one block-diagonal MXU matmul ----
        if has_expand:
            t = jnp.dot(x2.astype(mdt), w1_ref[...], preferred_element_type=f32)
            t = _act(t + b1_ref[...], use_hs)         # (HW, C) f32
        else:
            t = x2                                    # inp == hidden  ->  BC == C

        # ---- depthwise kxk conv on a zero-halo VMEM window ----
        # Only the halo strips are re-zeroed each grid step (interior is fully
        # overwritten); no program_id-gated init, so megacore sharding is safe.
        if P > 0:
            padbuf[0:P, :, :] = jnp.zeros((P, Wbuf, C), f32)
            padbuf[P + H:Hbuf, :, :] = jnp.zeros((P, Wbuf, C), f32)
            padbuf[P:P + H, 0:PADL, :] = jnp.zeros((H, PADL, C), f32)
            padbuf[P:P + H, PADL + W:Wbuf, :] = jnp.zeros((H, P, C), f32)
        # interior store is 8-sublane aligned (PADL = 8) -> unmasked stores
        padbuf[P:P + H, PADL:PADL + W, :] = t.reshape(H, W, C)

        d = jnp.zeros((Ho, Wo, C), f32)
        for kh in range(KH):
            for kw in range(KW):
                if stride == 1:
                    win = padbuf[kh:kh + Ho, col0 + kw:col0 + kw + Wo, :]
                else:
                    win = padbuf[pl.ds(kh, Ho, stride),
                                 pl.ds(col0 + kw, Wo, stride), :]
                tap = wdw_ref[kh * KW + kw:kh * KW + kw + 1, :].reshape(1, 1, C)
                d = d + win * tap
        d = d + b2_ref[...].reshape(1, 1, C)
        if not has_expand:
            d = _act(d, use_hs)
        d2 = d.reshape(HoWo, C)

        # ---- squeeze-and-excite: tiny block-diagonal FCs (M padded to one sublane) ----
        if use_se:
            pooled = jnp.mean(d2, axis=0, keepdims=True)          # (1, C)
            pooled8 = jnp.broadcast_to(pooled, (8, C))            # pad M to 8 rows
            s = jnp.dot(pooled8.astype(mdt), wse1_ref[...],
                        preferred_element_type=f32)
            s = jnp.maximum(s + bse1_ref[...], 0.0)
            s = jnp.dot(s.astype(mdt), wse2_ref[...],
                        preferred_element_type=f32)
            gate = _hsig(s + bse2_ref[...])[0:1, :]               # (1, C)
            d2 = d2 * gate
        if has_expand:
            d2 = _act(d2, use_hs)

        # ---- pad the flat-spatial axis to a multiple of 128 (lane-dense output) ----
        if MSP != HoWo:
            d2 = jnp.concatenate([d2, jnp.zeros((MSP - HoWo, C), f32)], axis=0)

        # ---- 1x1 project conv, transposed (A . B^T) -> (Bblk*oup, MSP): NCHW-flat ----
        out_cf = lax.dot_general(
            w3t_ref[...], d2.astype(mdt),
            dimension_numbers=(((1,), (1,)), ((), ())),
            preferred_element_type=f32)
        out_cf = out_cf + b3_ref[...]

        if identity:
            # residual add: x is DMA'd once; its (HW,BC)->(BC,HW) transpose is done on
            # the MXU with a block-diagonal identity (bf16 operands, exact 0/1 products).
            xr = x2
            if MSP != HoWo:
                xr = jnp.concatenate(
                    [xr, jnp.zeros((MSP - HoWo, BC), f32)], axis=0)
            res = lax.dot_general(
                eye_ref[...], xr.astype(mdt),
                dimension_numbers=(((1,), (1,)), ((), ())),
                preferred_element_type=f32)
            out_cf = out_cf + res

        o_ref[0] = out_cf.astype(o_ref.dtype)

    return kernel


# --------------------------------------------------------------------------------------
# Parameter construction / BN folding (inference semantics)
# --------------------------------------------------------------------------------------
def init_mobilenet_block_params(key, inp, oup, hidden_dim, kernel_size, use_se):
    f32 = jnp.float32
    keys = iter(jax.random.split(key, 16))

    def bn_params(k4, c):
        kg, kb, km, kv = jax.random.split(k4, 4)
        return (1.0 + 0.1 * jax.random.normal(kg, (c,), f32),
                0.1 * jax.random.normal(kb, (c,), f32),
                0.1 * jax.random.normal(km, (c,), f32),
                jax.nn.softplus(jax.random.normal(kv, (c,), f32)) + 0.5)

    p = {}
    if inp != hidden_dim:
        p['w1'] = 0.25 * jax.random.normal(next(keys), (hidden_dim, inp, 1, 1), f32)
        p['bn1'] = bn_params(next(keys), hidden_dim)
    p['wd'] = 0.2 * jax.random.normal(
        next(keys), (hidden_dim, 1, kernel_size, kernel_size), f32)
    p['bn2'] = bn_params(next(keys), hidden_dim)
    if use_se:
        hse = hidden_dim // 4
        p['se_w1'] = 0.3 * jax.random.normal(next(keys), (hse, hidden_dim), f32)
        p['se_b1'] = 0.1 * jax.random.normal(next(keys), (hse,), f32)
        p['se_w2'] = 0.3 * jax.random.normal(next(keys), (hidden_dim, hse), f32)
        p['se_b2'] = 0.1 * jax.random.normal(next(keys), (hidden_dim,), f32)
    p['w3'] = 0.2 * jax.random.normal(next(keys), (oup, hidden_dim, 1, 1), f32)
    p['bn3'] = bn_params(next(keys), oup)
    return p


def fold_block_params(params, *, inp, oup, hidden_dim, kernel_size, use_se,
                      eps=1e-5, matmul_dtype=jnp.bfloat16):
    """Fold BN running-stat scale into the conv weights; reshape for the kernel."""
    f32 = jnp.float32

    def bn_fold(bn):
        g, b, m, v = bn
        s = g / jnp.sqrt(v + eps)
        return s, b - m * s

    fp = {}
    if inp != hidden_dim:
        s1, b1 = bn_fold(params['bn1'])
        w1 = params['w1'].reshape(hidden_dim, inp).T * s1[None, :]        # (Cin, hidden)
        fp['w1'] = w1.astype(matmul_dtype)
        fp['b1'] = b1.reshape(1, hidden_dim).astype(f32)
    s2, b2 = bn_fold(params['bn2'])
    wd = params['wd'].reshape(hidden_dim, kernel_size, kernel_size)
    wdw = jnp.transpose(wd, (1, 2, 0)).reshape(kernel_size * kernel_size, hidden_dim)
    fp['wdw'] = (wdw * s2[None, :]).astype(f32)                           # VPU path: f32
    fp['b2'] = b2.reshape(1, hidden_dim).astype(f32)
    if use_se:
        fp['wse1'] = params['se_w1'].T.astype(matmul_dtype)               # (hidden, hse)
        fp['bse1'] = params['se_b1'].reshape(1, -1).astype(f32)
        fp['wse2'] = params['se_w2'].T.astype(matmul_dtype)               # (hse, hidden)
        fp['bse2'] = params['se_b2'].reshape(1, -1).astype(f32)
    s3, b3 = bn_fold(params['bn3'])
    fp['w3t'] = (params['w3'].reshape(oup, hidden_dim) * s3[:, None]).astype(matmul_dtype)
    fp['b3'] = b3.reshape(oup, 1).astype(f32)
    return fp


def _pick_block_batch(N, hidden_dim):
    """Largest divisor of N with Bblk*hidden <= 128 lanes, keeping >=2 grid steps."""
    Bblk = 1
    for d in range(1, N + 1):
        if N % d == 0 and d * hidden_dim <= 128:
            Bblk = d
    while Bblk > 1 and N // Bblk < 2:
        nxt = Bblk - 1
        while nxt > 1 and N % nxt != 0:
            nxt -= 1
        Bblk = nxt
    return Bblk


# --------------------------------------------------------------------------------------
# Public forward (NCHW in -> NCHW out)
# --------------------------------------------------------------------------------------
def mobilenet_block_forward(x_nchw, fp, *, inp, oup, hidden_dim, kernel_size,
                            stride, use_se, use_hs, matmul_dtype=jnp.bfloat16,
                            out_dtype=None, block_batch=None):
    assert stride in (1, 2)
    N, Cin, H, W = x_nchw.shape
    assert Cin == inp
    KH = KW = kernel_size
    P = (kernel_size - 1) // 2
    Ho = (H + 2 * P - KH) // stride + 1
    Wo = (W + 2 * P - KW) // stride + 1
    HoWo = Ho * Wo
    MSP = _round_up(HoWo, 128)                 # lane-dense output minor dim
    has_expand = inp != hidden_dim
    identity = (stride == 1) and (inp == oup)
    # Set out_dtype=jnp.bfloat16 to halve the output HBM write when the consumer
    # tolerates it; the default keeps the module's activation dtype (f32 here).
    out_dtype = x_nchw.dtype if out_dtype is None else out_dtype

    Bblk = _pick_block_batch(N, hidden_dim) if block_batch is None else block_batch
    assert N % Bblk == 0
    Nb = N // Bblk
    C, BC, BO = Bblk * hidden_dim, Bblk * Cin, Bblk * oup
    PADL = 8 if P > 0 else 0
    f32, mdt = jnp.float32, matmul_dtype

    # x: (N, Cin, H, W) -> (Nb, H*W, Bblk*Cin); the Bblk images of a block are
    # interleaved along the lane axis (layout plumbing only; single DMA of x).
    xp = x_nchw.astype(f32).reshape(Nb, Bblk, Cin, H, W)
    xp = jnp.transpose(xp, (0, 3, 4, 1, 2)).reshape(Nb, H * W, BC)

    def bd(w):   # block-diagonal replication over the Bblk packed images
        return jnp.kron(jnp.eye(Bblk, dtype=f32), w.astype(f32)).astype(w.dtype)

    inputs = [xp]
    in_specs = [pl.BlockSpec((1, H * W, BC), lambda n: (n, 0, 0))]

    def add(arr):
        inputs.append(arr)
        in_specs.append(pl.BlockSpec(arr.shape, lambda n, nd=arr.ndim: (0,) * nd))

    if has_expand:
        add(bd(fp['w1']))                          # (BC, C)
        add(jnp.tile(fp['b1'], (1, Bblk)))         # (1, C)
    add(jnp.tile(fp['wdw'], (1, Bblk)))            # (KH*KW, C)
    add(jnp.tile(fp['b2'], (1, Bblk)))             # (1, C)
    if use_se:
        add(bd(fp['wse1']))                        # (C, Bblk*hse)
        add(jnp.tile(fp['bse1'], (1, Bblk)))       # (1, Bblk*hse)
        add(bd(fp['wse2']))                        # (Bblk*hse, C)
        add(jnp.tile(fp['bse2'], (1, Bblk)))       # (1, C)
    add(bd(fp['w3t']))                             # (BO, C)
    add(jnp.tile(fp['b3'], (Bblk, 1)))             # (BO, 1)
    if identity:
        add(jnp.eye(BO, dtype=mdt))                # (BO, BC); BO == BC when identity

    kernel = _make_block_kernel(
        H=H, W=W, Cin=Cin, hidden=hidden_dim, oup=oup, KH=KH, KW=KW, stride=stride,
        P=P, PADL=PADL, Bblk=Bblk, MSP=MSP, has_expand=has_expand, use_se=use_se,
        use_hs=use_hs, identity=identity, mdt=mdt)

    flops = 2 * N * HoWo * KH * KW * hidden_dim + 2 * N * HoWo * hidden_dim * oup
    if has_expand:
        flops += 2 * N * H * W * Cin * hidden_dim
    if use_se:
        flops += 4 * N * hidden_dim * (hidden_dim // 4)
    if identity:
        flops += 2 * N * HoWo * Cin
    bytes_accessed = sum(int(a.size) * a.dtype.itemsize for a in inputs)
    bytes_accessed += Nb * BO * MSP * jnp.dtype(out_dtype).itemsize

    out = pl.pallas_call(
        kernel,
        out_shape=jax.ShapeDtypeStruct((Nb, BO, MSP), out_dtype),
        grid_spec=pltpu.PrefetchScalarGridSpec(
            num_scalar_prefetch=0,
            grid=(Nb,),
            in_specs=in_specs,
            out_specs=pl.BlockSpec((1, BO, MSP), lambda n: (n, 0, 0)),
            scratch_shapes=[
                pltpu.VMEM((H + 2 * P, PADL + W + P, C), jnp.float32)],
        ),
        compiler_params=pltpu.CompilerParams(
            dimension_semantics=("parallel",),
            vmem_limit_bytes=32 * 1024 * 1024),
        cost_estimate=pl.CostEstimate(flops=int(flops), transcendentals=0,
                                      bytes_accessed=int(bytes_accessed)),
    )(*inputs)

    # output is already NCHW-flat: reshape + crop the lane padding, no transpose.
    out = out.reshape(N, oup, MSP)[:, :, :HoWo]
    return out.reshape(N, oup, Ho, Wo)


# --------------------------------------------------------------------------------------
# References
# --------------------------------------------------------------------------------------
def _reference_raw(x, params, *, inp, oup, hidden_dim, kernel_size, stride,
                   use_se, use_hs, eps=1e-5):
    """Faithful f32 version of MobileNet_Block.forward (inference-mode BN)."""
    P = (kernel_size - 1) // 2
    dn = ("NCHW", "OIHW", "NCHW")

    def bn(y, bnp):
        g, b, m, v = bnp
        s = g / jnp.sqrt(v + eps)
        return y * s.reshape(1, -1, 1, 1) + (b - m * s).reshape(1, -1, 1, 1)

    y = x
    if inp != hidden_dim:
        y = lax.conv_general_dilated(y, params['w1'], (1, 1), ((0, 0), (0, 0)),
                                     dimension_numbers=dn)
        y = _act(bn(y, params['bn1']), use_hs)
    y = lax.conv_general_dilated(y, params['wd'], (stride, stride), ((P, P), (P, P)),
                                 feature_group_count=hidden_dim, dimension_numbers=dn)
    y = bn(y, params['bn2'])
    if inp == hidden_dim:
        y = _act(y, use_hs)
    if use_se:
        z = jnp.mean(y, axis=(2, 3))
        z = jnp.maximum(z @ params['se_w1'].T + params['se_b1'], 0.0)
        z = _hsig(z @ params['se_w2'].T + params['se_b2'])
        y = y * z[:, :, None, None]
    if inp != hidden_dim:
        y = _act(y, use_hs)
    y = lax.conv_general_dilated(y, params['w3'], (1, 1), ((0, 0), (0, 0)),
                                 dimension_numbers=dn)
    y = bn(y, params['bn3'])
    if stride == 1 and inp == oup:
        y = y + x
    return y


def _reference_folded(x, fp, *, inp, oup, hidden_dim, kernel_size, stride,
                      use_se, use_hs, matmul_dtype=jnp.bfloat16):
    """Mirrors the kernel math (same folded params / matmul dtypes) for a tight check."""
    N, Cin, H, W = x.shape
    KH = KW = kernel_size
    P = (KH - 1) // 2
    Ho = (H + 2 * P - KH) // stride + 1
    Wo = (W + 2 * P - KW) // stride + 1
    has_expand = inp != hidden_dim
    identity = stride == 1 and inp == oup
    f32 = jnp.float32
    mdt = matmul_dtype

    x32 = x.astype(f32)
    xh = jnp.transpose(x32, (0, 2, 3, 1)).reshape(N, H * W, Cin)
    if has_expand:
        t = jnp.einsum('nmc,ch->nmh', xh.astype(mdt), fp['w1'],
                       preferred_element_type=f32)
        t = _act(t + fp['b1'][None], use_hs)
    else:
        t = xh
    tp = jnp.pad(t.reshape(N, H, W, hidden_dim), ((0, 0), (P, P), (P, P), (0, 0)))
    d = jnp.zeros((N, Ho, Wo, hidden_dim), f32)
    for kh in range(KH):
        for kw in range(KW):
            win = tp[:, kh:kh + stride * Ho:stride, kw:kw + stride * Wo:stride, :]
            d = d + win * fp['wdw'][kh * KW + kw].reshape(1, 1, 1, hidden_dim)
    d = d + fp['b2'].reshape(1, 1, 1, hidden_dim)
    if not has_expand:
        d = _act(d, use_hs)
    d2 = d.reshape(N, Ho * Wo, hidden_dim)
    if use_se:
        pooled = jnp.mean(d2, axis=1)
        s = jnp.dot(pooled.astype(mdt), fp['wse1'], preferred_element_type=f32)
        s = jnp.maximum(s + fp['bse1'], 0.0)
        s = jnp.dot(s.astype(mdt), fp['wse2'], preferred_element_type=f32)
        d2 = d2 * _hsig(s + fp['bse2'])[:, None, :]
    if has_expand:
        d2 = _act(d2, use_hs)
    out = jnp.einsum('oc,nmc->nom', fp['w3t'], d2.astype(mdt),
                     preferred_element_type=f32)
    out = out + fp['b3'][None]
    if identity:
        # kernel residual == x rounded to bf16 (exact 0/1 identity matmul)
        out = out + x32.reshape(N, Cin, H * W).astype(mdt).astype(f32)
    return out.reshape(N, oup, Ho, Wo)


# --------------------------------------------------------------------------------------
if __name__ == "__main__":
    key = jax.random.PRNGKey(0)
    kx, kp = jax.random.split(key)

    # MobileNet_Block(inp=16, oup=16, hidden_dim=32, kernel_size=3, stride=1,
    #                 use_se=1, use_hs=1): expand + depthwise + SE + h_swish + project,
    # with the identity (residual) path active.  batch=16 so Bblk=4 images are packed
    # on the lane axis (128 depthwise lanes) and the grid still has 4 steps.
    N, inp, oup, hidden_dim, ksize = 16, 16, 16, 32, 3
    stride, use_se, use_hs = 1, True, True
    H = W = 16

    x = jax.random.normal(kx, (N, inp, H, W), jnp.float32)
    params = init_mobilenet_block_params(kp, inp, oup, hidden_dim, ksize, use_se)
    fp = fold_block_params(params, inp=inp, oup=oup, hidden_dim=hidden_dim,
                           kernel_size=ksize, use_se=use_se)

    out = mobilenet_block_forward(x, fp, inp=inp, oup=oup, hidden_dim=hidden_dim,
                                  kernel_size=ksize, stride=stride,
                                  use_se=use_se, use_hs=use_hs)
    out = jax.block_until_ready(out)

    ref_tight = _reference_folded(x, fp, inp=inp, oup=oup, hidden_dim=hidden_dim,
                                  kernel_size=ksize, stride=stride,
                                  use_se=use_se, use_hs=use_hs)
    ref_raw = _reference_raw(x, params, inp=inp, oup=oup, hidden_dim=hidden_dim,
                             kernel_size=ksize, stride=stride,
                             use_se=use_se, use_hs=use_hs)

    assert out.shape == ref_raw.shape, (out.shape, ref_raw.shape)
    err_tight = float(jnp.max(jnp.abs(out - ref_tight)))
    err_raw = float(jnp.max(jnp.abs(out - ref_raw)))
    # tight: same folded params and matmul dtypes as the kernel -> only accumulation noise
    assert err_tight < 5e-3, ("tight check failed", err_tight)
    # loose: full-f32 module reference; slack covers the deliberate bf16 matmul operands
    assert err_raw < 0.2, ("raw check failed", err_raw)
    print("KERNEL_OK")
</pallas_src>

<mosaic_0001>
module attributes {stable_mosaic.version = 11 : i64} {
  func.func @kernel(%arg0: i32, %arg1: memref<1x256x64xf32, #tpu.memory_space<vmem>>, %arg2: memref<64x128xbf16, #tpu.memory_space<vmem>>, %arg3: memref<1x128xf32, #tpu.memory_space<vmem>>, %arg4: memref<9x128xf32, #tpu.memory_space<vmem>>, %arg5: memref<1x128xf32, #tpu.memory_space<vmem>>, %arg6: memref<128x32xbf16, #tpu.memory_space<vmem>>, %arg7: memref<1x32xf32, #tpu.memory_space<vmem>>, %arg8: memref<32x128xbf16, #tpu.memory_space<vmem>>, %arg9: memref<1x128xf32, #tpu.memory_space<vmem>>, %arg10: memref<64x128xbf16, #tpu.memory_space<vmem>>, %arg11: memref<64x1xf32, #tpu.memory_space<vmem>>, %arg12: memref<64x64xbf16, #tpu.memory_space<vmem>>, %arg13: memref<1x64x256xf32, #tpu.memory_space<vmem>>, %arg14: memref<18x25x128xf32, #tpu.memory_space<vmem>>) attributes {dimension_semantics = [#tpu.dimension_semantics<parallel>], iteration_bounds = array<i64: 4>, scalar_prefetch = 0 : i64, scratch_operands = 1 : i64, tpu.core_type = #tpu.core_type<tc>, window_params = [{transform_indices = @transform_0, window_bounds = array<i64: 1, 256, 64>}, {pipeline_mode = #tpu.pipeline_mode<synchronous>, transform_indices = @transform_1, window_bounds = array<i64: 64, 128>}, {pipeline_mode = #tpu.pipeline_mode<synchronous>, transform_indices = @transform_2, window_bounds = array<i64: 1, 128>}, {pipeline_mode = #tpu.pipeline_mode<synchronous>, transform_indices = @transform_3, window_bounds = array<i64: 9, 128>}, {pipeline_mode = #tpu.pipeline_mode<synchronous>, transform_indices = @transform_4, window_bounds = array<i64: 1, 128>}, {pipeline_mode = #tpu.pipeline_mode<synchronous>, transform_indices = @transform_5, window_bounds = array<i64: 128, 32>}, {pipeline_mode = #tpu.pipeline_mode<synchronous>, transform_indices = @transform_6, window_bounds = array<i64: 1, 32>}, {pipeline_mode = #tpu.pipeline_mode<synchronous>, transform_indices = @transform_7, window_bounds = array<i64: 32, 128>}, {pipeline_mode = #tpu.pipeline_mode<synchronous>, transform_indices = @transform_8, window_bounds = array<i64: 1, 128>}, {pipeline_mode = #tpu.pipeline_mode<synchronous>, transform_indices = @transform_9, window_bounds = array<i64: 64, 128>}, {pipeline_mode = #tpu.pipeline_mode<synchronous>, transform_indices = @transform_10, window_bounds = array<i64: 64, 1>}, {pipeline_mode = #tpu.pipeline_mode<synchronous>, transform_indices = @transform_11, window_bounds = array<i64: 64, 64>}, {transform_indices = @transform_12, window_bounds = array<i64: 1, 64, 256>}]} {
    %c0 = arith.constant 0 : index
    %c0_0 = arith.constant 0 : index
    %c0_1 = arith.constant 0 : index
    %0 = vector.load %arg1[%c0, %c0_0, %c0_1] : memref<1x256x64xf32, #tpu.memory_space<vmem>>, vector<1x256x64xf32>
    %1 = vector.shape_cast %0 : vector<1x256x64xf32> to vector<256x64xf32>
    %2 = arith.truncf %1 : vector<256x64xf32> to vector<256x64xbf16>
    %c0_2 = arith.constant 0 : index
    %c0_3 = arith.constant 0 : index
    %3 = vector.load %arg2[%c0_2, %c0_3] : memref<64x128xbf16, #tpu.memory_space<vmem>>, vector<64x128xbf16>
    %cst = arith.constant dense<0.000000e+00> : vector<256x128xf32>
    %4 = tpu.matmul %2, %3, %cst {dimension_numbers = #tpu.dot_dimension_numbers<[1], [0], [0], [1], [0, 0, 1, 1], [], []>} : vector<256x64xbf16>, vector<64x128xbf16>, vector<256x128xf32> -> vector<256x128xf32>
    %c0_4 = arith.constant 0 : index
    %c0_5 = arith.constant 0 : index
    %5 = vector.load %arg3[%c0_4, %c0_5] : memref<1x128xf32, #tpu.memory_space<vmem>>, vector<1x128xf32>
    %6 = vector.broadcast %5 : vector<1x128xf32> to vector<256x128xf32>
    %7 = arith.addf %4, %6 : vector<256x128xf32>
    %cst_6 = arith.constant 3.000000e+00 : f32
    %8 = vector.broadcast %cst_6 : f32 to vector<256x128xf32>
    %9 = arith.addf %7, %8 : vector<256x128xf32>
    %cst_7 = arith.constant 0.000000e+00 : f32
    %cst_8 = arith.constant 6.000000e+00 : f32
    %10 = vector.broadcast %cst_7 : f32 to vector<256x128xf32>
    %11 = arith.maximumf %10, %9 : vector<256x128xf32>
    %12 = vector.broadcast %cst_8 : f32 to vector<256x128xf32>
    %13 = arith.minimumf %12, %11 : vector<256x128xf32>
    %cst_9 = arith.constant 0.166666672 : f32
    %14 = vector.broadcast %cst_9 : f32 to vector<256x128xf32>
    %15 = arith.mulf %13, %14 : vector<256x128xf32>
    %16 = arith.mulf %7, %15 : vector<256x128xf32>
    %cst_10 = arith.constant 0.000000e+00 : f32
    %17 = vector.broadcast %cst_10 : f32 to vector<1x25x128xf32>
    %c0_11 = arith.constant 0 : index
    %c0_12 = arith.constant 0 : index
    %c0_13 = arith.constant 0 : index
    %18 = vector.load %arg14[%c0_11, %c0_12, %c0_13] : memref<18x25x128xf32, #tpu.memory_space<vmem>>, vector<1x25x128xf32>
    tpu.vector_store %arg14[%c0_11, %c0_12, %c0_13], %17 {strides = array<i32>} : memref<18x25x128xf32, #tpu.memory_space<vmem>>, vector<1x25x128xf32>,
    %cst_14 = arith.constant 0.000000e+00 : f32
    %19 = vector.broadcast %cst_14 : f32 to vector<1x25x128xf32>
    %c17 = arith.constant 17 : index
    %c0_15 = arith.constant 0 : index
    %c0_16 = arith.constant 0 : index
    %20 = vector.load %arg14[%c17, %c0_15, %c0_16] : memref<18x25x128xf32, #tpu.memory_space<vmem>>, vector<1x25x128xf32>
    tpu.vector_store %arg14[%c17, %c0_15, %c0_16], %19 {strides = array<i32>} : memref<18x25x128xf32, #tpu.memory_space<vmem>>, vector<1x25x128xf32>,
    %cst_17 = arith.constant 0.000000e+00 : f32
    %21 = vector.broadcast %cst_17 : f32 to vector<16x8x128xf32>
    %c1 = arith.constant 1 : index
    %c0_18 = arith.constant 0 : index
    %c0_19 = arith.constant 0 : index
    %22 = vector.load %arg14[%c1, %c0_18, %c0_19] : memref<18x25x128xf32, #tpu.memory_space<vmem>>, vector<16x8x128xf32>
    tpu.vector_store %arg14[%c1, %c0_18, %c0_19], %21 {strides = array<i32>} : memref<18x25x128xf32, #tpu.memory_space<vmem>>, vector<16x8x128xf32>,
    %cst_20 = arith.constant 0.000000e+00 : f32
    %23 = vector.broadcast %cst_20 : f32 to vector<16x1x128xf32>
    %c1_21 = arith.constant 1 : index
    %c24 = arith.constant 24 : index
    %c0_22 = arith.constant 0 : index
    %24 = vector.load %arg14[%c1_21, %c24, %c0_22] : memref<18x25x128xf32, #tpu.memory_space<vmem>>, vector<16x1x128xf32>
    tpu.vector_store %arg14[%c1_21, %c24, %c0_22], %23 {strides = array<i32>} : memref<18x25x128xf32, #tpu.memory_space<vmem>>, vector<16x1x128xf32>,
    %25 = vector.shape_cast %16 : vector<256x128xf32> to vector<16x16x128xf32>
    %c1_23 = arith.constant 1 : index
    %c8 = arith.constant 8 : index
    %c0_24 = arith.constant 0 : index
    %26 = vector.load %arg14[%c1_23, %c8, %c0_24] : memref<18x25x128xf32, #tpu.memory_space<vmem>>, vector<16x16x128xf32>
    tpu.vector_store %arg14[%c1_23, %c8, %c0_24], %25 {strides = array<i32>} : memref<18x25x128xf32, #tpu.memory_space<vmem>>, vector<16x16x128xf32>,
    %cst_25 = arith.constant 0.000000e+00 : f32
    %27 = vector.broadcast %cst_25 : f32 to vector<16x16x128xf32>
    %c0_26 = arith.constant 0 : index
    %c7 = arith.constant 7 : index
    %c0_27 = arith.constant 0 : index
    %28 = vector.load %arg14[%c0_26, %c7, %c0_27] : memref<18x25x128xf32, #tpu.memory_space<vmem>>, vector<16x16x128xf32>
    %c0_28 = arith.constant 0 : index
    %c0_29 = arith.constant 0 : index
    %29 = vector.load %arg4[%c0_28, %c0_29] : memref<9x128xf32, #tpu.memory_space<vmem>>, vector<1x128xf32>
    %30 = vector.shape_cast %29 : vector<1x128xf32> to vector<1x1x128xf32>
    %31 = vector.broadcast %30 : vector<1x1x128xf32> to vector<16x16x128xf32>
    %32 = arith.mulf %28, %31 : vector<16x16x128xf32>
    %33 = arith.addf %27, %32 : vector<16x16x128xf32>
    %c0_30 = arith.constant 0 : index
    %c8_31 = arith.constant 8 : index
    %c0_32 = arith.constant 0 : index
    %34 = vector.load %arg14[%c0_30, %c8_31, %c0_32] : memref<18x25x128xf32, #tpu.memory_space<vmem>>, vector<16x16x128xf32>
    %c1_33 = arith.constant 1 : index
    %c0_34 = arith.constant 0 : index
    %35 = vector.load %arg4[%c1_33, %c0_34] : memref<9x128xf32, #tpu.memory_space<vmem>>, vector<1x128xf32>
    %36 = vector.shape_cast %35 : vector<1x128xf32> to vector<1x1x128xf32>
    %37 = vector.broadcast %36 : vector<1x1x128xf32> to vector<16x16x128xf32>
    %38 = arith.mulf %34, %37 : vector<16x16x128xf32>
    %39 = arith.addf %33, %38 : vector<16x16x128xf32>
    %c0_35 = arith.constant 0 : index
    %c9 = arith.constant 9 : index
    %c0_36 = arith.constant 0 : index
    %40 = vector.load %arg14[%c0_35, %c9, %c0_36] : memref<18x25x128xf32, #tpu.memory_space<vmem>>, vector<16x16x128xf32>
    %c2 = arith.constant 2 : index
    %c0_37 = arith.constant 0 : index
    %41 = vector.load %arg4[%c2, %c0_37] : memref<9x128xf32, #tpu.memory_space<vmem>>, vector<1x128xf32>
    %42 = vector.shape_cast %41 : vector<1x128xf32> to vector<1x1x128xf32>
    %43 = vector.broadcast %42 : vector<1x1x128xf32> to vector<16x16x128xf32>
    %44 = arith.mulf %40, %43 : vector<16x16x128xf32>
    %45 = arith.addf %39, %44 : vector<16x16x128xf32>
    %c1_38 = arith.constant 1 : index
    %c7_39 = arith.constant 7 : index
    %c0_40 = arith.constant 0 : index
    %46 = vector.load %arg14[%c1_38, %c7_39, %c0_40] : memref<18x25x128xf32, #tpu.memory_space<vmem>>, vector<16x16x128xf32>
    %c3 = arith.constant 3 : index
    %c0_41 = arith.constant 0 : index
    %47 = vector.load %arg4[%c3, %c0_41] : memref<9x128xf32, #tpu.memory_space<vmem>>, vector<1x128xf32>
    %48 = vector.shape_cast %47 : vector<1x128xf32> to vector<1x1x128xf32>
    %49 = vector.broadcast %48 : vector<1x1x128xf32> to vector<16x16x128xf32>
    %50 = arith.mulf %46, %49 : vector<16x16x128xf32>
    %51 = arith.addf %45, %50 : vector<16x16x128xf32>
    %c1_42 = arith.constant 1 : index
    %c8_43 = arith.constant 8 : index
    %c0_44 = arith.constant 0 : index
    %52 = vector.load %arg14[%c1_42, %c8_43, %c0_44] : memref<18x25x128xf32, #tpu.memory_space<vmem>>, vector<16x16x128xf32>
    %c4 = arith.constant 4 : index
    %c0_45 = arith.constant 0 : index
    %53 = vector.load %arg4[%c4, %c0_45] : memref<9x128xf32, #tpu.memory_space<vmem>>, vector<1x128xf32>
    %54 = vector.shape_cast %53 : vector<1x128xf32> to vector<1x1x128xf32>
    %55 = vector.broadcast %54 : vector<1x1x128xf32> to vector<16x16x128xf32>
    %56 = arith.mulf %52, %55 : vector<16x16x128xf32>
    %57 = arith.addf %51, %56 : vector<16x16x128xf32>
    %c1_46 = arith.constant 1 : index
    %c9_47 = arith.constant 9 : index
    %c0_48 = arith.constant 0 : index
    %58 = vector.load %arg14[%c1_46, %c9_47, %c0_48] : memref<18x25x128xf32, #tpu.memory_space<vmem>>, vector<16x16x128xf32>
    %c5 = arith.constant 5 : index
    %c0_49 = arith.constant 0 : index
    %59 = vector.load %arg4[%c5, %c0_49] : memref<9x128xf32, #tpu.memory_space<vmem>>, vector<1x128xf32>
    %60 = vector.shape_cast %59 : vector<1x128xf32> to vector<1x1x128xf32>
    %61 = vector.broadcast %60 : vector<1x1x128xf32> to vector<16x16x128xf32>
    %62 = arith.mulf %58, %61 : vector<16x16x128xf32>
    %63 = arith.addf %57, %62 : vector<16x16x128xf32>
    %c2_50 = arith.constant 2 : index
    %c7_51 = arith.constant 7 : index
    %c0_52 = arith.constant 0 : index
    %64 = vector.load %arg14[%c2_50, %c7_51, %c0_52] : memref<18x25x128xf32, #tpu.memory_space<vmem>>, vector<16x16x128xf32>
    %c6 = arith.constant 6 : index
    %c0_53 = arith.constant 0 : index
    %65 = vector.load %arg4[%c6, %c0_53] : memref<9x128xf32, #tpu.memory_space<vmem>>, vector<1x128xf32>
    %66 = vector.shape_cast %65 : vector<1x128xf32> to vector<1x1x128xf32>
    %67 = vector.broadcast %66 : vector<1x1x128xf32> to vector<16x16x128xf32>
    %68 = arith.mulf %64, %67 : vector<16x16x128xf32>
    %69 = arith.addf %63, %68 : vector<16x16x128xf32>
    %c2_54 = arith.constant 2 : index
    %c8_55 = arith.constant 8 : index
    %c0_56 = arith.constant 0 : index
    %70 = vector.load %arg14[%c2_54, %c8_55, %c0_56] : memref<18x25x128xf32, #tpu.memory_space<vmem>>, vector<16x16x128xf32>
    %c7_57 = arith.constant 7 : index
    %c0_58 = arith.constant 0 : index
    %71 = vector.load %arg4[%c7_57, %c0_58] : memref<9x128xf32, #tpu.memory_space<vmem>>, vector<1x128xf32>
    %72 = vector.shape_cast %71 : vector<1x128xf32> to vector<1x1x128xf32>
    %73 = vector.broadcast %72 : vector<1x1x128xf32> to vector<16x16x128xf32>
    %74 = arith.mulf %70, %73 : vector<16x16x128xf32>
    %75 = arith.addf %69, %74 : vector<16x16x128xf32>
    %c2_59 = arith.constant 2 : index
    %c9_60 = arith.constant 9 : index
    %c0_61 = arith.constant 0 : index
    %76 = vector.load %arg14[%c2_59, %c9_60, %c0_61] : memref<18x25x128xf32, #tpu.memory_space<vmem>>, vector<16x16x128xf32>
    %c8_62 = arith.constant 8 : index
    %c0_63 = arith.constant 0 : index
    %77 = vector.load %arg4[%c8_62, %c0_63] : memref<9x128xf32, #tpu.memory_space<vmem>>, vector<1x128xf32>
    %78 = vector.shape_cast %77 : vector<1x128xf32> to vector<1x1x128xf32>
    %79 = vector.broadcast %78 : vector<1x1x128xf32> to vector<16x16x128xf32>
    %80 = arith.mulf %76, %79 : vector<16x16x128xf32>
    %81 = arith.addf %75, %80 : vector<16x16x128xf32>
    %c0_64 = arith.constant 0 : index
    %c0_65 = arith.constant 0 : index
    %82 = vector.load %arg5[%c0_64, %c0_65] : memref<1x128xf32, #tpu.memory_space<vmem>>, vector<1x128xf32>
    %83 = vector.shape_cast %82 : vector<1x128xf32> to vector<1x1x128xf32>
    %84 = vector.broadcast %83 : vector<1x1x128xf32> to vector<16x16x128xf32>
    %85 = arith.addf %81, %84 : vector<16x16x128xf32>
    %86 = vector.shape_cast %85 : vector<16x16x128xf32> to vector<256x128xf32>
    %cst_66 = arith.constant dense<0.000000e+00> : vector<128xf32>
    %87 = vector.multi_reduction <add>, %86, %cst_66 [0] : vector<256x128xf32> to vector<128xf32>
    %88 = vector.shape_cast %87 : vector<128xf32> to vector<1x128xf32>
    %cst_67 = arith.constant 2.560000e+02 : f32
    %89 = vector.broadcast %cst_67 : f32 to vector<1x128xf32>
    %90 = arith.divf %88, %89 : vector<1x128xf32>
    %91 = vector.shape_cast %90 : vector<1x128xf32> to vector<1x128xf32>
    %92 = vector.broadcast %91 : vector<1x128xf32> to vector<8x128xf32>
    %93 = arith.truncf %92 : vector<8x128xf32> to vector<8x128xbf16>
    %c0_68 = arith.constant 0 : index
    %c0_69 = arith.constant 0 : index
    %94 = vector.load %arg6[%c0_68, %c0_69] : memref<128x32xbf16, #tpu.memory_space<vmem>>, vector<128x32xbf16>
    %cst_70 = arith.constant dense<0.000000e+00> : vector<8x32xf32>
    %95 = tpu.matmul %93, %94, %cst_70 {dimension_numbers = #tpu.dot_dimension_numbers<[1], [0], [0], [1], [0, 0, 1, 1], [], []>} : vector<8x128xbf16>, vector<128x32xbf16>, vector<8x32xf32> -> vector<8x32xf32>
    %c0_71 = arith.constant 0 : index
    %c0_72 = arith.constant 0 : index
    %96 = vector.load %arg7[%c0_71, %c0_72] : memref<1x32xf32, #tpu.memory_space<vmem>>, vector<1x32xf32>
    %97 = vector.broadcast %96 : vector<1x32xf32> to vector<8x32xf32>
    %98 = arith.addf %95, %97 : vector<8x32xf32>
    %cst_73 = arith.constant 0.000000e+00 : f32
    %99 = vector.broadcast %cst_73 : f32 to vector<8x32xf32>
    %100 = arith.maximumf %98, %99 : vector<8x32xf32>
    %101 = arith.truncf %100 : vector<8x32xf32> to vector<8x32xbf16>
    %c0_74 = arith.constant 0 : index
    %c0_75 = arith.constant 0 : index
    %102 = vector.load %arg8[%c0_74, %c0_75] : memref<32x128xbf16, #tpu.memory_space<vmem>>, vector<32x128xbf16>
    %cst_76 = arith.constant dense<0.000000e+00> : vector<8x128xf32>
    %103 = tpu.matmul %101, %102, %cst_76 {dimension_numbers = #tpu.dot_dimension_numbers<[1], [0], [0], [1], [0, 0, 1, 1], [], []>} : vector<8x32xbf16>, vector<32x128xbf16>, vector<8x128xf32> -> vector<8x128xf32>
    %c0_77 = arith.constant 0 : index
    %c0_78 = arith.constant 0 : index
    %104 = vector.load %arg9[%c0_77, %c0_78] : memref<1x128xf32, #tpu.memory_space<vmem>>, vector<1x128xf32>
    %105 = vector.broadcast %104 : vector<1x128xf32> to vector<8x128xf32>
    %106 = arith.addf %103, %105 : vector<8x128xf32>
    %cst_79 = arith.constant 3.000000e+00 : f32
    %107 = vector.broadcast %cst_79 : f32 to vector<8x128xf32>
    %108 = arith.addf %106, %107 : vector<8x128xf32>
    %cst_80 = arith.constant 0.000000e+00 : f32
    %cst_81 = arith.constant 6.000000e+00 : f32
    %109 = vector.broadcast %cst_80 : f32 to vector<8x128xf32>
    %110 = arith.maximumf %109, %108 : vector<8x128xf32>
    %111 = vector.broadcast %cst_81 : f32 to vector<8x128xf32>
    %112 = arith.minimumf %111, %110 : vector<8x128xf32>
    %cst_82 = arith.constant 0.166666672 : f32
    %113 = vector.broadcast %cst_82 : f32 to vector<8x128xf32>
    %114 = arith.mulf %112, %113 : vector<8x128xf32>
    %115 = vector.extract_strided_slice %114 {offsets = [0, 0], sizes = [1, 128], strides = [1, 1]} : vector<8x128xf32> to vector<1x128xf32>
    %116 = vector.broadcast %115 : vector<1x128xf32> to vector<256x128xf32>
    %117 = arith.mulf %86, %116 : vector<256x128xf32>
    %cst_83 = arith.constant 3.000000e+00 : f32
    %118 = vector.broadcast %cst_83 : f32 to vector<256x128xf32>
    %119 = arith.addf %117, %118 : vector<256x128xf32>
    %cst_84 = arith.constant 0.000000e+00 : f32
    %cst_85 = arith.constant 6.000000e+00 : f32
    %120 = vector.broadcast %cst_84 : f32 to vector<256x128xf32>
    %121 = arith.maximumf %120, %119 : vector<256x128xf32>
    %122 = vector.broadcast %cst_85 : f32 to vector<256x128xf32>
    %123 = arith.minimumf %122, %121 : vector<256x128xf32>
    %cst_86 = arith.constant 0.166666672 : f32
    %124 = vector.broadcast %cst_86 : f32 to vector<256x128xf32>
    %125 = arith.mulf %123, %124 : vector<256x128xf32>
    %126 = arith.mulf %117, %125 : vector<256x128xf32>
    %c0_87 = arith.constant 0 : index
    %c0_88 = arith.constant 0 : index
    %127 = vector.load %arg10[%c0_87, %c0_88] : memref<64x128xbf16, #tpu.memory_space<vmem>>, vector<64x128xbf16>
    %128 = arith.truncf %126 : vector<256x128xf32> to vector<256x128xbf16>
    %cst_89 = arith.constant dense<0.000000e+00> : vector<64x256xf32>
    %129 = tpu.matmul %127, %128, %cst_89 {dimension_numbers = #tpu.dot_dimension_numbers<[1], [1], [0], [0], [0, 0, 1, 0], [], []>} : vector<64x128xbf16>, vector<256x128xbf16>, vector<64x256xf32> -> vector<64x256xf32>
    %c0_90 = arith.constant 0 : index
    %c0_91 = arith.constant 0 : index
    %130 = vector.load %arg11[%c0_90, %c0_91] : memref<64x1xf32, #tpu.memory_space<vmem>>, vector<64x1xf32>
    %131 = vector.broadcast %130 : vector<64x1xf32> to vector<64x256xf32>
    %132 = arith.addf %129, %131 : vector<64x256xf32>
    %c0_92 = arith.constant 0 : index
    %c0_93 = arith.constant 0 : index
    %133 = vector.load %arg12[%c0_92, %c0_93] : memref<64x64xbf16, #tpu.memory_space<vmem>>, vector<64x64xbf16>
    %134 = arith.truncf %1 : vector<256x64xf32> to vector<256x64xbf16>
    %cst_94 = arith.constant dense<0.000000e+00> : vector<64x256xf32>
    %135 = tpu.matmul %133, %134, %cst_94 {dimension_numbers = #tpu.dot_dimension_numbers<[1], [1], [0], [0], [0, 0, 1, 0], [], []>} : vector<64x64xbf16>, vector<256x64xbf16>, vector<64x256xf32> -> vector<64x256xf32>
    %136 = arith.addf %132, %135 : vector<64x256xf32>
    %c0_95 = arith.constant 0 : index
    %c0_96 = arith.constant 0 : index
    %c0_97 = arith.constant 0 : index
    %137 = vector.load %arg13[%c0_95, %c0_96, %c0_97] : memref<1x64x256xf32, #tpu.memory_space<vmem>>, vector<1x64x256xf32>
    %138 = vector.shape_cast %137 : vector<1x64x256xf32> to vector<64x256xf32>
    %139 = vector.shape_cast %136 : vector<64x256xf32> to vector<1x64x256xf32>
    tpu.vector_store %arg13[%c0_95, %c0_96, %c0_97], %139 {strides = array<i32>} : memref<1x64x256xf32, #tpu.memory_space<vmem>>, vector<1x64x256xf32>,
    return
  }
  func.func @transform_0(%arg0: i32) -> (i32, i32, i32) {
    %c0_i32 = arith.constant 0 : i32
    %c0_i32_0 = arith.constant 0 : i32
    %c0_i32_1 = arith.constant 0 : i32
    return %arg0, %c0_i32, %c0_i32_0 : i32, i32, i32
  }
  func.func @transform_1(%arg0: i32) -> (i32, i32) {
    %c0_i32 = arith.constant 0 : i32
    %c0_i32_0 = arith.constant 0 : i32
    %c0_i32_1 = arith.constant 0 : i32
    return %c0_i32, %c0_i32_0 : i32, i32
  }
  func.func @transform_2(%arg0: i32) -> (i32, i32) {
    %c0_i32 = arith.constant 0 : i32
    %c0_i32_0 = arith.constant 0 : i32
    %c0_i32_1 = arith.constant 0 : i32
    return %c0_i32, %c0_i32_0 : i32, i32
  }
  func.func @transform_3(%arg0: i32) -> (i32, i32) {
    %c0_i32 = arith.constant 0 : i32
    %c0_i32_0 = arith.constant 0 : i32
    %c0_i32_1 = arith.constant 0 : i32
    return %c0_i32, %c0_i32_0 : i32, i32
  }
  func.func @transform_4(%arg0: i32) -> (i32, i32) {
    %c0_i32 = arith.constant 0 : i32
    %c0_i32_0 = arith.constant 0 : i32
    %c0_i32_1 = arith.constant 0 : i32
    return %c0_i32, %c0_i32_0 : i32, i32
  }
  func.func @transform_5(%arg0: i32) -> (i32, i32) {
    %c0_i32 = arith.constant 0 : i32
    %c0_i32_0 = arith.constant 0 : i32
    %c0_i32_1 = arith.constant 0 : i32
    return %c0_i32, %c0_i32_0 : i32, i32
  }
  func.func @transform_6(%arg0: i32) -> (i32, i32) {
    %c0_i32 = arith.constant 0 : i32
    %c0_i32_0 = arith.constant 0 : i32
    %c0_i32_1 = arith.constant 0 : i32
    return %c0_i32, %c0_i32_0 : i32, i32
  }
  func.func @transform_7(%arg0: i32) -> (i32, i32) {
    %c0_i32 = arith.constant 0 : i32
    %c0_i32_0 = arith.constant 0 : i32
    %c0_i32_1 = arith.constant 0 : i32
    return %c0_i32, %c0_i32_0 : i32, i32
  }
  func.func @transform_8(%arg0: i32) -> (i32, i32) {
    %c0_i32 = arith.constant 0 : i32
    %c0_i32_0 = arith.constant 0 : i32
    %c0_i32_1 = arith.constant 0 : i32
    return %c0_i32, %c0_i32_0 : i32, i32
  }
  func.func @transform_9(%arg0: i32) -> (i32, i32) {
    %c0_i32 = arith.constant 0 : i32
    %c0_i32_0 = arith.constant 0 : i32
    %c0_i32_1 = arith.constant 0 : i32
    return %c0_i32, %c0_i32_0 : i32, i32
  }
  func.func @transform_10(%arg0: i32) -> (i32, i32) {
    %c0_i32 = arith.constant 0 : i32
    %c0_i32_0 = arith.constant 0 : i32
    %c0_i32_1 = arith.constant 0 : i32
    return %c0_i32, %c0_i32_0 : i32, i32
  }
  func.func @transform_11(%arg0: i32) -> (i32, i32) {
    %c0_i32 = arith.constant 0 : i32
    %c0_i32_0 = arith.constant 0 : i32
    %c0_i32_1 = arith.constant 0 : i32
    return %c0_i32, %c0_i32_0 : i32, i32
  }
  func.func @transform_12(%arg0: i32) -> (i32, i32, i32) {
    %c0_i32 = arith.constant 0 : i32
    %c0_i32_0 = arith.constant 0 : i32
    %c0_i32_1 = arith.constant 0 : i32
    return %arg0, %c0_i32, %c0_i32_0 : i32, i32, i32
  }
}

</mosaic_0001>

<llo_original>
// kernel: tpu_custom_call.1
$region0: #{tpu_custom_call.1}
  #allocation0 [shape = 'u32[]', space=smem, size = 0x4, offset = 0x4, fixed_abs, tag = 'smem constant byte address 0x4 - core index']
  #allocation1 [shape = 'u32[72,128]{1,0:T(1,128)}', space=vmem, size = 0x9000, scoped, tag = 'internal scratch']
  #allocation2 [shape = 'f32[18,25,128]{2,1,0:T(8,128)}', space=vmem, size = 0x48000, scoped, tag = 'scratch operand']
  %s0 = inlined_call_operand.vmem [shape: f32[4,256,64], index: 0, kind: input, shape index: {}]
  %s1 = inlined_call_operand.vmem [shape: bf16[64,128], index: 1, kind: input, shape index: {}]
  %s2 = inlined_call_operand.vmem [shape: f32[1,128], index: 2, kind: input, shape index: {}]
  %s3 = inlined_call_operand.vmem [shape: f32[9,128], index: 3, kind: input, shape index: {}]
  %s4 = inlined_call_operand.vmem [shape: f32[1,128], index: 4, kind: input, shape index: {}]
  %s5 = inlined_call_operand.vmem [shape: bf16[128,32], index: 5, kind: input, shape index: {}]
  %s6 = inlined_call_operand.vmem [shape: f32[1,32], index: 6, kind: input, shape index: {}]
  %s7 = inlined_call_operand.vmem [shape: bf16[32,128], index: 7, kind: input, shape index: {}]
  %s8 = inlined_call_operand.vmem [shape: f32[1,128], index: 8, kind: input, shape index: {}]
  %s9 = inlined_call_operand.vmem [shape: bf16[64,128], index: 9, kind: input, shape index: {}]
  %s10 = inlined_call_operand.vmem [shape: f32[64,1], index: 10, kind: input, shape index: {}]
  %s11 = inlined_call_operand.vmem [shape: bf16[64,64], index: 11, kind: input, shape index: {}]
  %s12 = inlined_call_operand.hbm [shape: f32[4,64,256], index: 12, kind: output, shape index: {}]
  %s13 = sld [smem:[#allocation0]]
  $region81: #{tpu_custom_call.1} parent=0
    _
  %s15 = ssub.s32 1, %s13
  %s16 = scalar_select 0, %s15, %s13
  $region1: #{tpu_custom_call.1} parent=0
    #allocation3 [shape = 'u8[131072]{0}', space=vmem, size = 0x20000, scoped, tag = 'output window, operand 0']
    #allocation4 [shape = 's32[2]{0}', space=sflag, size = 0x8, scoped, tag = 'scoped memory for tpu_custom_call.1']
    %17 = vsyncpa [#allocation4], 0
    %s18 = scalar_lea.sflag [#allocation4], 1
    %19 = vsyncpa %s18, 0
    loop: start=0, step=1, limit=6
    $region2: #{tpu_custom_call.1} parent=1 // loop_pre_header
      _
    $region3: #{tpu_custom_call.1} parent=1 // loop_header
      %s21 = sphi 0, %s25
      %p22 = scmp.ge.s32.totalorder %s21, 6
      %s31 = sphi 0, %s33
      %s34 = sphi 0, %s31
      %s35 = sphi 0, %s34
      %s51 = sphi 0, %s35
      %s55 = sphi 0, %s55
      %s57 = sphi 0, %s55
      %s58 = sphi 0, %s57
      %s72 = sphi 0, %s58
      %s76 = sphi 0, %s76
      %s78 = sphi 0, %s76
      %s79 = sphi 0, %s78
      %s93 = sphi 0, %s79
      %s97 = sphi 0, %s97
      %s99 = sphi 0, %s97
      %s100 = sphi 0, %s99
      %s114 = sphi 0, %s100
      %s118 = sphi 0, %s118
      %s120 = sphi 0, %s118
      %s121 = sphi 0, %s120
      %s135 = sphi 0, %s121
      %s139 = sphi 0, %s139
      %s141 = sphi 0, %s139
      %s142 = sphi 0, %s141
      %s156 = sphi 0, %s142
      %s160 = sphi 0, %s160
      %s162 = sphi 0, %s160
      %s163 = sphi 0, %s162
      %s177 = sphi 0, %s163
      %s181 = sphi 0, %s181
      %s183 = sphi 0, %s181
      %s184 = sphi 0, %s183
      %s198 = sphi 0, %s184
      %s202 = sphi 0, %s202
      %s204 = sphi 0, %s202
      %s205 = sphi 0, %s204
      %s219 = sphi 0, %s205
      %s223 = sphi 0, %s223
      %s225 = sphi 0, %s223
      %s226 = sphi 0, %s225
      %s240 = sphi 0, %s226
      %s244 = sphi 0, %s244
      %s246 = sphi 0, %s244
      %s247 = sphi 0, %s246
      %s261 = sphi 0, %s247
      %s265 = sphi 0, %s265
      %s267 = sphi 0, %s265
      %s268 = sphi 0, %s267
      %s282 = sphi 0, %s268
      %s288 = sphi 0, %s290
      %s291 = sphi 0, %s288
      %s292 = sphi 0, %s291
      %s308 = sphi 0, %s292
    $region4: #{tpu_custom_call.1} parent=1 // loop_header_branch
      %24 = sbr.rel (%p22) target = $region8
    $region5: #{tpu_custom_call.1} parent=1 // loop_body
      %s26 = ssub.s32 %s21, 1
      %s27 = ssub.s32 %s21, 2
      %s28 = sadd.s32 %s21, 1
      %s29 = ssub.s32 %s21, %s28
      %p30 = scmp.eq.s32.totalorder %s29, 0
      %s32 = sadd.s32 %s31, 1
      %s33 = scalar_select %p30, %s31, %s32
      %p36 = pneg %p30
      %p37 = scmp.eq.s32.totalorder %s21, 3
      %p38 = por %p36, %p37
      %p39 = scmp.ne.s32.totalorder %s31, %s34
      %p40 = scmp.eq.s32.totalorder %s21, 0
      %p41 = por %p39, %p40
      %p42 = scmp.ne.s32.totalorder %s31, %s34
      %p43 = scmp.eq.s32.totalorder %s26, 3
      %p44 = por %p42, %p43
      %p45 = scmp.ne.s32.totalorder %s34, %s35
      %p46 = scmp.eq.s32.totalorder %s26, 0
      %p47 = por %p45, %p46
      %p48 = scmp.ne.s32.totalorder %s34, %s35
      %p49 = scmp.eq.s32.totalorder %s27, 3
      %p50 = por %p48, %p49
      %p52 = scmp.ne.s32.totalorder %s35, %s51
      %p53 = scmp.eq.s32.totalorder %s27, 0
      %p54 = por %p52, %p53
      %s56 = sadd.s32 %s55, 1
      %p59 = scmp.eq.s32.totalorder %s21, 3
      %p60 = scmp.ne.s32.totalorder %s55, %s57
      %p61 = scmp.eq.s32.totalorder %s21, 0
      %p62 = por %p60, %p61
      %p63 = scmp.ne.s32.totalorder %s55, %s57
      %p64 = scmp.eq.s32.totalorder %s26, 3
      %p65 = por %p63, %p64
      %p66 = scmp.ne.s32.totalorder %s57, %s58
      %p67 = scmp.eq.s32.totalorder %s26, 0
      %p68 = por %p66, %p67
      %p69 = scmp.ne.s32.totalorder %s57, %s58
      %p70 = scmp.eq.s32.totalorder %s27, 3
      %p71 = por %p69, %p70
      %p73 = scmp.ne.s32.totalorder %s58, %s72
      %p74 = scmp.eq.s32.totalorder %s27, 0
      %p75 = por %p73, %p74
      %s77 = sadd.s32 %s76, 1
      %p80 = scmp.eq.s32.totalorder %s21, 3
      %p81 = scmp.ne.s32.totalorder %s76, %s78
      %p82 = scmp.eq.s32.totalorder %s21, 0
      %p83 = por %p81, %p82
      %p84 = scmp.ne.s32.totalorder %s76, %s78
      %p85 = scmp.eq.s32.totalorder %s26, 3
      %p86 = por %p84, %p85
      %p87 = scmp.ne.s32.totalorder %s78, %s79
      %p88 = scmp.eq.s32.totalorder %s26, 0
      %p89 = por %p87, %p88
      %p90 = scmp.ne.s32.totalorder %s78, %s79
      %p91 = scmp.eq.s32.totalorder %s27, 3
      %p92 = por %p90, %p91
      %p94 = scmp.ne.s32.totalorder %s79, %s93
      %p95 = scmp.eq.s32.totalorder %s27, 0
      %p96 = por %p94, %p95
      %s98 = sadd.s32 %s97, 1
      %p101 = scmp.eq.s32.totalorder %s21, 3
      %p102 = scmp.ne.s32.totalorder %s97, %s99
      %p103 = scmp.eq.s32.totalorder %s21, 0
      %p104 = por %p102, %p103
      %p105 = scmp.ne.s32.totalorder %s97, %s99
      %p106 = scmp.eq.s32.totalorder %s26, 3
      %p107 = por %p105, %p106
      %p108 = scmp.ne.s32.totalorder %s99, %s100
      %p109 = scmp.eq.s32.totalorder %s26, 0
      %p110 = por %p108, %p109
      %p111 = scmp.ne.s32.totalorder %s99, %s100
      %p112 = scmp.eq.s32.totalorder %s27, 3
      %p113 = por %p111, %p112
      %p115 = scmp.ne.s32.totalorder %s100, %s114
      %p116 = scmp.eq.s32.totalorder %s27, 0
      %p117 = por %p115, %p116
      %s119 = sadd.s32 %s118, 1
      %p122 = scmp.eq.s32.totalorder %s21, 3
      %p123 = scmp.ne.s32.totalorder %s118, %s120
      %p124 = scmp.eq.s32.totalorder %s21, 0
      %p125 = por %p123, %p124
      %p126 = scmp.ne.s32.totalorder %s118, %s120
      %p127 = scmp.eq.s32.totalorder %s26, 3
      %p128 = por %p126, %p127
      %p129 = scmp.ne.s32.totalorder %s120, %s121
      %p130 = scmp.eq.s32.totalorder %s26, 0
      %p131 = por %p129, %p130
      %p132 = scmp.ne.s32.totalorder %s120, %s121
      %p133 = scmp.eq.s32.totalorder %s27, 3
      %p134 = por %p132, %p133
      %p136 = scmp.ne.s32.totalorder %s121, %s135
      %p137 = scmp.eq.s32.totalorder %s27, 0
      %p138 = por %p136, %p137
      %s140 = sadd.s32 %s139, 1
      %p143 = scmp.eq.s32.totalorder %s21, 3
      %p144 = scmp.ne.s32.totalorder %s139, %s141
      %p145 = scmp.eq.s32.totalorder %s21, 0
      %p146 = por %p144, %p145
      %p147 = scmp.ne.s32.totalorder %s139, %s141
      %p148 = scmp.eq.s32.totalorder %s26, 3
      %p149 = por %p147, %p148
      %p150 = scmp.ne.s32.totalorder %s141, %s142
      %p151 = scmp.eq.s32.totalorder %s26, 0
      %p152 = por %p150, %p151
      %p153 = scmp.ne.s32.totalorder %s141, %s142
      %p154 = scmp.eq.s32.totalorder %s27, 3
      %p155 = por %p153, %p154
      %p157 = scmp.ne.s32.totalorder %s142, %s156
      %p158 = scmp.eq.s32.totalorder %s27, 0
      %p159 = por %p157, %p158
      %s161 = sadd.s32 %s160, 1
      %p164 = scmp.eq.s32.totalorder %s21, 3
      %p165 = scmp.ne.s32.totalorder %s160, %s162
      %p166 = scmp.eq.s32.totalorder %s21, 0
      %p167 = por %p165, %p166
      %p168 = scmp.ne.s32.totalorder %s160, %s162
      %p169 = scmp.eq.s32.totalorder %s26, 3
      %p170 = por %p168, %p169
      %p171 = scmp.ne.s32.totalorder %s162, %s163
      %p172 = scmp.eq.s32.totalorder %s26, 0
      %p173 = por %p171, %p172
      %p174 = scmp.ne.s32.totalorder %s162, %s163
      %p175 = scmp.eq.s32.totalorder %s27, 3
      %p176 = por %p174, %p175
      %p178 = scmp.ne.s32.totalorder %s163, %s177
      %p179 = scmp.eq.s32.totalorder %s27, 0
      %p180 = por %p178, %p179
      %s182 = sadd.s32 %s181, 1
      %p185 = scmp.eq.s32.totalorder %s21, 3
      %p186 = scmp.ne.s32.totalorder %s181, %s183
      %p187 = scmp.eq.s32.totalorder %s21, 0
      %p188 = por %p186, %p187
      %p189 = scmp.ne.s32.totalorder %s181, %s183
      %p190 = scmp.eq.s32.totalorder %s26, 3
      %p191 = por %p189, %p190
      %p192 = scmp.ne.s32.totalorder %s183, %s184
      %p193 = scmp.eq.s32.totalorder %s26, 0
      %p194 = por %p192, %p193
      %p195 = scmp.ne.s32.totalorder %s183, %s184
      %p196 = scmp.eq.s32.totalorder %s27, 3
      %p197 = por %p195, %p196
      %p199 = scmp.ne.s32.totalorder %s184, %s198
      %p200 = scmp.eq.s32.totalorder %s27, 0
      %p201 = por %p199, %p200
      %s203 = sadd.s32 %s202, 1
      %p206 = scmp.eq.s32.totalorder %s21, 3
      %p207 = scmp.ne.s32.totalorder %s202, %s204
      %p208 = scmp.eq.s32.totalorder %s21, 0
      %p209 = por %p207, %p208
      %p210 = scmp.ne.s32.totalorder %s202, %s204
      %p211 = scmp.eq.s32.totalorder %s26, 3
      %p212 = por %p210, %p211
      %p213 = scmp.ne.s32.totalorder %s204, %s205
      %p214 = scmp.eq.s32.totalorder %s26, 0
      %p215 = por %p213, %p214
      %p216 = scmp.ne.s32.totalorder %s204, %s205
      %p217 = scmp.eq.s32.totalorder %s27, 3
      %p218 = por %p216, %p217
      %p220 = scmp.ne.s32.totalorder %s205, %s219
      %p221 = scmp.eq.s32.totalorder %s27, 0
      %p222 = por %p220, %p221
      %s224 = sadd.s32 %s223, 1
      %p227 = scmp.eq.s32.totalorder %s21, 3
      %p228 = scmp.ne.s32.totalorder %s223, %s225
      %p229 = scmp.eq.s32.totalorder %s21, 0
      %p230 = por %p228, %p229
      %p231 = scmp.ne.s32.totalorder %s223, %s225
      %p232 = scmp.eq.s32.totalorder %s26, 3
      %p233 = por %p231, %p232
      %p234 = scmp.ne.s32.totalorder %s225, %s226
      %p235 = scmp.eq.s32.totalorder %s26, 0
      %p236 = por %p234, %p235
      %p237 = scmp.ne.s32.totalorder %s225, %s226
      %p238 = scmp.eq.s32.totalorder %s27, 3
      %p239 = por %p237, %p238
      %p241 = scmp.ne.s32.totalorder %s226, %s240
      %p242 = scmp.eq.s32.totalorder %s27, 0
      %p243 = por %p241, %p242
      %s245 = sadd.s32 %s244, 1
      %p248 = scmp.eq.s32.totalorder %s21, 3
      %p249 = scmp.ne.s32.totalorder %s244, %s246
      %p250 = scmp.eq.s32.totalorder %s21, 0
      %p251 = por %p249, %p250
      %p252 = scmp.ne.s32.totalorder %s244, %s246
      %p253 = scmp.eq.s32.totalorder %s26, 3
      %p254 = por %p252, %p253
      %p255 = scmp.ne.s32.totalorder %s246, %s247
      %p256 = scmp.eq.s32.totalorder %s26, 0
      %p257 = por %p255, %p256
      %p258 = scmp.ne.s32.totalorder %s246, %s247
      %p259 = scmp.eq.s32.totalorder %s27, 3
      %p260 = por %p258, %p259
      %p262 = scmp.ne.s32.totalorder %s247, %s261
      %p263 = scmp.eq.s32.totalorder %s27, 0
      %p264 = por %p262, %p263
      %s266 = sadd.s32 %s265, 1
      %p269 = scmp.eq.s32.totalorder %s21, 3
      %p270 = scmp.ne.s32.totalorder %s265, %s267
      %p271 = scmp.eq.s32.totalorder %s21, 0
      %p272 = por %p270, %p271
      %p273 = scmp.ne.s32.totalorder %s265, %s267
      %p274 = scmp.eq.s32.totalorder %s26, 3
      %p275 = por %p273, %p274
      %p276 = scmp.ne.s32.totalorder %s267, %s268
      %p277 = scmp.eq.s32.totalorder %s26, 0
      %p278 = por %p276, %p277
      %p279 = scmp.ne.s32.totalorder %s267, %s268
      %p280 = scmp.eq.s32.totalorder %s27, 3
      %p281 = por %p279, %p280
      %p283 = scmp.ne.s32.totalorder %s268, %s282
      %p284 = scmp.eq.s32.totalorder %s27, 0
      %p285 = por %p283, %p284
      %s286 = ssub.s32 %s21, %s28
      %p287 = scmp.eq.s32.totalorder %s286, 0
      %s289 = sadd.s32 %s288, 1
      %s290 = scalar_select %p287, %s288, %s289
      %p293 = pneg %p287
      %p294 = scmp.eq.s32.totalorder %s21, 3
      %p295 = por %p293, %p294
      %p296 = scmp.ne.s32.totalorder %s288, %s291
      %p297 = scmp.eq.s32.totalorder %s21, 0
      %p298 = por %p296, %p297
      %p299 = scmp.ne.s32.totalorder %s288, %s291
      %p300 = scmp.eq.s32.totalorder %s26, 3
      %p301 = por %p299, %p300
      %p302 = scmp.ne.s32.totalorder %s291, %s292
      %p303 = scmp.eq.s32.totalorder %s26, 0
      %p304 = por %p302, %p303
      %p305 = scmp.ne.s32.totalorder %s291, %s292
      %p306 = scmp.eq.s32.totalorder %s27, 3
      %p307 = por %p305, %p306
      %p309 = scmp.ne.s32.totalorder %s292, %s308
      %p310 = scmp.eq.s32.totalorder %s27, 0
      %p311 = por %p309, %p310
      %p312 = scmp.le.s32.totalorder 1, %s21
      %p313 = scmp.lt.s32.totalorder %s21, 5
      %p314 = pnand %p312, %p313
      %p315 = pneg %p314
      // Predicated region
      $region9: #{tpu_custom_call.1} parent=5 // pred_check
        _
      $region10: #{tpu_custom_call.1} parent=5 // pred_check_branch
        %317 = sbr.rel (%p314) target = $region12
      $region11: #{tpu_custom_call.1} parent=5 // pred_region
        %s318 = ssub.s32 %s21, 1
        // Predicated region
        $region13: #{tpu_custom_call.1} parent=11 // pred_check
          %p319 = pneg %p68
        $region14: #{tpu_custom_call.1} parent=11 // pred_check_branch
          %321 = sbr.rel (%p319) target = $region16
        $region15: #{tpu_custom_call.1} parent=11 // pred_region
          _
        $region16: #{tpu_custom_call.1} parent=11 // pred_fallthru
          _
        // Predicated region
        $region17: #{tpu_custom_call.1} parent=11 // pred_check
          %p322 = pneg %p89
        $region18: #{tpu_custom_call.1} parent=11 // pred_check_branch
          %324 = sbr.rel (%p322) target = $region20
        $region19: #{tpu_custom_call.1} parent=11 // pred_region
          _
        $region20: #{tpu_custom_call.1} parent=11 // pred_fallthru
          _
        // Predicated region
        $region21: #{tpu_custom_call.1} parent=11 // pred_check
          %p325 = pneg %p110
        $region22: #{tpu_custom_call.1} parent=11 // pred_check_branch
          %327 = sbr.rel (%p325) target = $region24
        $region23: #{tpu_custom_call.1} parent=11 // pred_region
          _
        $region24: #{tpu_custom_call.1} parent=11 // pred_fallthru
          _
        // Predicated region
        $region25: #{tpu_custom_call.1} parent=11 // pred_check
          %p328 = pneg %p131
        $region26: #{tpu_custom_call.1} parent=11 // pred_check_branch
          %330 = sbr.rel (%p328) target = $region28
        $region27: #{tpu_custom_call.1} parent=11 // pred_region
          _
        $region28: #{tpu_custom_call.1} parent=11 // pred_fallthru
          _
        // Predicated region
        $region29: #{tpu_custom_call.1} parent=11 // pred_check
          %p331 = pneg %p152
        $region30: #{tpu_custom_call.1} parent=11 // pred_check_branch
          %333 = sbr.rel (%p331) target = $region32
        $region31: #{tpu_custom_call.1} parent=11 // pred_region
          _
        $region32: #{tpu_custom_call.1} parent=11 // pred_fallthru
          _
        // Predicated region
        $region33: #{tpu_custom_call.1} parent=11 // pred_check
          %p334 = pneg %p173
        $region34: #{tpu_custom_call.1} parent=11 // pred_check_branch
          %336 = sbr.rel (%p334) target = $region36
        $region35: #{tpu_custom_call.1} parent=11 // pred_region
          _
        $region36: #{tpu_custom_call.1} parent=11 // pred_fallthru
          _
        // Predicated region
        $region37: #{tpu_custom_call.1} parent=11 // pred_check
          %p337 = pneg %p194
        $region38: #{tpu_custom_call.1} parent=11 // pred_check_branch
          %339 = sbr.rel (%p337) target = $region40
        $region39: #{tpu_custom_call.1} parent=11 // pred_region
          _
        $region40: #{tpu_custom_call.1} parent=11 // pred_fallthru
          _
        // Predicated region
        $region41: #{tpu_custom_call.1} parent=11 // pred_check
          %p340 = pneg %p215
        $region42: #{tpu_custom_call.1} parent=11 // pred_check_branch
          %342 = sbr.rel (%p340) target = $region44
        $region43: #{tpu_custom_call.1} parent=11 // pred_region
          _
        $region44: #{tpu_custom_call.1} parent=11 // pred_fallthru
          _
        // Predicated region
        $region45: #{tpu_custom_call.1} parent=11 // pred_check
          %p343 = pneg %p236
        $region46: #{tpu_custom_call.1} parent=11 // pred_check_branch
          %345 = sbr.rel (%p343) target = $region48
        $region47: #{tpu_custom_call.1} parent=11 // pred_region
          _
        $region48: #{tpu_custom_call.1} parent=11 // pred_fallthru
          _
        // Predicated region
        $region49: #{tpu_custom_call.1} parent=11 // pred_check
          %p346 = pneg %p257
        $region50: #{tpu_custom_call.1} parent=11 // pred_check_branch
          %348 = sbr.rel (%p346) target = $region52
        $region51: #{tpu_custom_call.1} parent=11 // pred_region
          _
        $region52: #{tpu_custom_call.1} parent=11 // pred_fallthru
          _
        // Predicated region
        $region53: #{tpu_custom_call.1} parent=11 // pred_check
          %p349 = pneg %p278
        $region54: #{tpu_custom_call.1} parent=11 // pred_check_branch
          %351 = sbr.rel (%p349) target = $region56
        $region55: #{tpu_custom_call.1} parent=11 // pred_region
          _
        $region56: #{tpu_custom_call.1} parent=11 // pred_fallthru
          _
      $region12: #{tpu_custom_call.1} parent=5 // pred_fallthru
        _
      %p352 = scmp.lt.s32.totalorder %s21, 4
      // Predicated region
      $region57: #{tpu_custom_call.1} parent=5 // pred_check
        %p353 = pneg %p352
      $region58: #{tpu_custom_call.1} parent=5 // pred_check_branch
        %355 = sbr.rel (%p353) target = $region60
      $region59: #{tpu_custom_call.1} parent=5 // pred_region
        // Predicated region
        $region61: #{tpu_custom_call.1} parent=59 // pred_check
          %p356 = pneg %p41
        $region62: #{tpu_custom_call.1} parent=59 // pred_check_branch
          %358 = sbr.rel (%p356) target = $region64
        $region63: #{tpu_custom_call.1} parent=59 // pred_region
          %p359 = scmp.lt.s32.totalorder %s21, 3
          %s360 = scalar_select %p359, %s21, 3
          %s361 = smul.addr %s360, 32
          %s362 = smul.addr %s361, 8
          %s363 = scalar_lea.vmem %s0, %s362
        $region64: #{tpu_custom_call.1} parent=59 // pred_fallthru
          _
      $region60: #{tpu_custom_call.1} parent=5 // pred_fallthru
        _
      %p364 = scmp.le.s32.totalorder 1, %s21
      %p365 = scmp.lt.s32.totalorder %s21, 5
      %p366 = pnand %p364, %p365
      %p367 = pneg %p366
      // Predicated region
      $region65: #{tpu_custom_call.1} parent=5 // pred_check
        _
      $region66: #{tpu_custom_call.1} parent=5 // pred_check_branch
        %369 = sbr.rel (%p366) target = $region68
      $region67: #{tpu_custom_call.1} parent=5 // pred_region
        %s370 = ssub.s32 %s21, 1
        %p371 = scmp.lt.s32.totalorder %s26, 3
        %s372 = scalar_select %p371, %s26, 3
        %s373 = smul.addr %s372, 32
        %s374 = smul.addr %s373, 8
        %s375 = scalar_lea.vmem %s0, %s374
        %p376 = pneg %p47
        %p377 = pneg %p44
        %p378 = pneg %p68
        %p379 = pneg %p65
        %p380 = pneg %p89
        %p381 = pneg %p86
        %p382 = pneg %p110
        %p383 = pneg %p107
        %p384 = pneg %p131
        %p385 = pneg %p128
        %p386 = pneg %p152
        %p387 = pneg %p149
        %p388 = pneg %p173
        %p389 = pneg %p170
        %p390 = pneg %p194
        %p391 = pneg %p191
        %p392 = pneg %p215
        %p393 = pneg %p212
        %p394 = pneg %p236
        %p395 = pneg %p233
        %p396 = pneg %p257
        %p397 = pneg %p254
        %p398 = pneg %p278
        %p399 = pneg %p275
        %p400 = pneg %p304
        %p401 = pneg %p301
        %s402 = sand.u32 %s291, 1
        %s403 = scalar_lea.sflag [#allocation4], %s402
        %s404 = sand.u32 %s291, 1
        %s405 = smul.addr %s404, 128
        %s406 = scalar_lea.vmem [#allocation3], %s405
        %p407 = scmp.lt.s32.totalorder %s26, 3
        %s408 = scalar_select %p407, %s26, 3
        %s409 = smul.addr %s408, 32
        %s410 = smul.addr %s409, 8
        %s411 = scalar_lea.vmem %s0, %s410
        %v413 = vld [vmem:[%s411] sm:$0xff]
        %v414 = vld [vmem:[%s411 + $0x8] sm:$0xff]
        %v415 = vld [vmem:[%s411 + $0x10] sm:$0xff]
        %v416 = vld [vmem:[%s411 + $0x18] sm:$0xff]
        %v417 = vld [vmem:[%s411 + $0x20] sm:$0xff]
        %v418 = vld [vmem:[%s411 + $0x28] sm:$0xff]
        %v419 = vld [vmem:[%s411 + $0x30] sm:$0xff]
        %v420 = vld [vmem:[%s411 + $0x38] sm:$0xff]
        %v421 = vld [vmem:[%s411 + $0x40] sm:$0xff]
        %v422 = vld [vmem:[%s411 + $0x48] sm:$0xff]
        %v423 = vld [vmem:[%s411 + $0x50] sm:$0xff]
        %v424 = vld [vmem:[%s411 + $0x58] sm:$0xff]
        %v425 = vld [vmem:[%s411 + $0x60] sm:$0xff]
        %v426 = vld [vmem:[%s411 + $0x68] sm:$0xff]
        %v427 = vld [vmem:[%s411 + $0x70] sm:$0xff]
        %v428 = vld [vmem:[%s411 + $0x78] sm:$0xff]
        %v429 = vld [vmem:[%s411 + $0x80] sm:$0xff]
        %v430 = vld [vmem:[%s411 + $0x88] sm:$0xff]
        %v431 = vld [vmem:[%s411 + $0x90] sm:$0xff]
        %v432 = vld [vmem:[%s411 + $0x98] sm:$0xff]
        %v433 = vld [vmem:[%s411 + $0xa0] sm:$0xff]
        %v434 = vld [vmem:[%s411 + $0xa8] sm:$0xff]
        %v435 = vld [vmem:[%s411 + $0xb0] sm:$0xff]
        %v436 = vld [vmem:[%s411 + $0xb8] sm:$0xff]
        %v437 = vld [vmem:[%s411 + $0xc0] sm:$0xff]
        %v438 = vld [vmem:[%s411 + $0xc8] sm:$0xff]
        %v439 = vld [vmem:[%s411 + $0xd0] sm:$0xff]
        %v440 = vld [vmem:[%s411 + $0xd8] sm:$0xff]
        %v441 = vld [vmem:[%s411 + $0xe0] sm:$0xff]
        %v442 = vld [vmem:[%s411 + $0xe8] sm:$0xff]
        %v443 = vld [vmem:[%s411 + $0xf0] sm:$0xff]
        %v444 = vld [vmem:[%s411 + $0xf8] sm:$0xff]
        %v445 = vpack.c.bf16 %v414, %v413
        %v446 = vpack.c.bf16 %v416, %v415
        %v447 = vpack.c.bf16 %v418, %v417
        %v448 = vpack.c.bf16 %v420, %v419
        %v449 = vpack.c.bf16 %v422, %v421
        %v450 = vpack.c.bf16 %v424, %v423
        %v451 = vpack.c.bf16 %v426, %v425
        %v452 = vpack.c.bf16 %v428, %v427
        %v453 = vpack.c.bf16 %v430, %v429
        %v454 = vpack.c.bf16 %v432, %v431
        %v455 = vpack.c.bf16 %v434, %v433
        %v456 = vpack.c.bf16 %v436, %v435
        %v457 = vpack.c.bf16 %v438, %v437
        %v458 = vpack.c.bf16 %v440, %v439
        %v459 = vpack.c.bf16 %v442, %v441
        %v460 = vpack.c.bf16 %v444, %v443
        %v461 = vld [vmem:[%s1] sm:$0xf]
        %v462 = vld [vmem:[%s1 + $0x4] sm:$0xf]
        %v463 = vld [vmem:[%s1 + $0x8] sm:$0xf]
        %v464 = vld [vmem:[%s1 + $0xc] sm:$0xf]
        %v465 = vld [vmem:[%s1 + $0x10] sm:$0xf]
        %v466 = vld [vmem:[%s1 + $0x14] sm:$0xf]
        %v467 = vld [vmem:[%s1 + $0x18] sm:$0xf]
        %v468 = vld [vmem:[%s1 + $0x1c] sm:$0xf]
        %v469 = vld [vmem:[%s2] sm:$0x1]
        %v471 = vperm.slane %v469, 0
        %v481 = vunpack.c.l.b16 %v461
        %v482 = vunpack.c.l.b16 %v462
        %v483 = vunpack.c.l.b16 %v463
        %v484 = vunpack.c.l.b16 %v464
        %v485 = vunpack.c.l.b16 %v465
        %v486 = vunpack.c.l.b16 %v466
        %v487 = vunpack.c.l.b16 %v467
        %v488 = vunpack.c.l.b16 %v468
        %v489 = vpack.c.b16 %v482, %v481
        %v490 = vpack.c.b16 %v484, %v483
        %v491 = vpack.c.b16 %v486, %v485
        %v492 = vpack.c.b16 %v488, %v487
        %vm497 = vcmask 523264
        %v499 = vsel %vm497, %v445, 0
        %v502 = vsel %vm497, %v446, 0
        %v505 = vsel %vm497, %v447, 0
        %v508 = vsel %vm497, %v448, 0
        %v511 = vsel %vm497, %v449, 0
        %v514 = vsel %vm497, %v450, 0
        %v517 = vsel %vm497, %v451, 0
        %v520 = vsel %vm497, %v452, 0
        %v523 = vsel %vm497, %v453, 0
        %v526 = vsel %vm497, %v454, 0
        %v529 = vsel %vm497, %v455, 0
        %v532 = vsel %vm497, %v456, 0
        %v535 = vsel %vm497, %v457, 0
        %v538 = vsel %vm497, %v458, 0
        %v541 = vsel %vm497, %v459, 0
        %v544 = vsel %vm497, %v460, 0
        %546 = vmatpush.bf16.msra.mxu0 0
        %547 = vmatpush.bf16.msra.mxu0 0
        %548 = vmatpush.bf16.msra.mxu0 0
        %549 = vmatpush.bf16.msra.mxu0 0
        %550 = vmatpush.bf16.msra.mxu0 %v492
        %551 = vmatpush.bf16.msra.mxu0 %v491
        %552 = vmatpush.bf16.msra.mxu0 %v490
        %553 = vmatpush.bf16.msra.mxu0 %v489
        %554 = vmatmul.bf16.gmra.mxu0 %v499
        %v555 = vpop.f32.mrf.mxu0
        %v556 = vadd.f32 %v471, %v555
        %v557 = vpop.f32.mrf.mxu0
        %v558 = vadd.f32 %v471, %v557
        %559 = vmatmul.bf16.gmra.mxu0 %v502
        %v560 = vpop.f32.mrf.mxu0
        %v561 = vadd.f32 %v471, %v560
        %v562 = vpop.f32.mrf.mxu0
        %v563 = vadd.f32 %v471, %v562
        %564 = vmatmul.bf16.gmra.mxu0 %v505
        %v565 = vpop.f32.mrf.mxu0
        %v566 = vadd.f32 %v471, %v565
        %v567 = vpop.f32.mrf.mxu0
        %v568 = vadd.f32 %v471, %v567
        %569 = vmatmul.bf16.gmra.mxu0 %v508
        %v570 = vpop.f32.mrf.mxu0
        %v571 = vadd.f32 %v471, %v570
        %v572 = vpop.f32.mrf.mxu0
        %v573 = vadd.f32 %v471, %v572
        %574 = vmatmul.bf16.gmra.mxu0 %v511
        %v575 = vpop.f32.mrf.mxu0
        %v576 = vadd.f32 %v471, %v575
        %v577 = vpop.f32.mrf.mxu0
        %v578 = vadd.f32 %v471, %v577
        %579 = vmatmul.bf16.gmra.mxu0 %v514
        %v580 = vpop.f32.mrf.mxu0
        %v581 = vadd.f32 %v471, %v580
        %v582 = vpop.f32.mrf.mxu0
        %v583 = vadd.f32 %v471, %v582
        %584 = vmatmul.bf16.gmra.mxu0 %v517
        %v585 = vpop.f32.mrf.mxu0
        %v586 = vadd.f32 %v471, %v585
        %v587 = vpop.f32.mrf.mxu0
        %v588 = vadd.f32 %v471, %v587
        %589 = vmatmul.bf16.gmra.mxu0 %v520
        %v590 = vpop.f32.mrf.mxu0
        %v591 = vadd.f32 %v471, %v590
        %v592 = vpop.f32.mrf.mxu0
        %v593 = vadd.f32 %v471, %v592
        %594 = vmatmul.bf16.gmra.mxu0 %v523
        %v595 = vpop.f32.mrf.mxu0
        %v596 = vadd.f32 %v471, %v595
        %v597 = vpop.f32.mrf.mxu0
        %v598 = vadd.f32 %v471, %v597
        %599 = vmatmul.bf16.gmra.mxu0 %v526
        %v600 = vpop.f32.mrf.mxu0
        %v601 = vadd.f32 %v471, %v600
        %v602 = vpop.f32.mrf.mxu0
        %v603 = vadd.f32 %v471, %v602
        %604 = vmatmul.bf16.gmra.mxu0 %v529
        %v605 = vpop.f32.mrf.mxu0
        %v606 = vadd.f32 %v471, %v605
        %v607 = vpop.f32.mrf.mxu0
        %v608 = vadd.f32 %v471, %v607
        %609 = vmatmul.bf16.gmra.mxu0 %v532
        %v610 = vpop.f32.mrf.mxu0
        %v611 = vadd.f32 %v471, %v610
        %v612 = vpop.f32.mrf.mxu0
        %v613 = vadd.f32 %v471, %v612
        %614 = vmatmul.bf16.gmra.mxu0 %v535
        %v615 = vpop.f32.mrf.mxu0
        %v616 = vadd.f32 %v471, %v615
        %v617 = vpop.f32.mrf.mxu0
        %v618 = vadd.f32 %v471, %v617
        %619 = vmatmul.bf16.gmra.mxu0 %v538
        %v620 = vpop.f32.mrf.mxu0
        %v621 = vadd.f32 %v471, %v620
        %v622 = vpop.f32.mrf.mxu0
        %v623 = vadd.f32 %v471, %v622
        %624 = vmatmul.bf16.gmra.mxu0 %v541
        %v625 = vpop.f32.mrf.mxu0
        %v626 = vadd.f32 %v471, %v625
        %v627 = vpop.f32.mrf.mxu0
        %v628 = vadd.f32 %v471, %v627
        %629 = vmatmul.bf16.gmra.mxu0 %v544
        %v630 = vpop.f32.mrf.mxu0
        %v631 = vadd.f32 %v471, %v630
        %v632 = vpop.f32.mrf.mxu0
        %v633 = vadd.f32 %v471, %v632
        %634 = vdwg.mxu0
        %v635 = vadd.f32 %v556, 3.0
        %v636 = vadd.f32 %v558, 3.0
        %v637 = vadd.f32 %v561, 3.0
        %v638 = vadd.f32 %v563, 3.0
        %v639 = vadd.f32 %v566, 3.0
        %v640 = vadd.f32 %v568, 3.0
        %v641 = vadd.f32 %v571, 3.0
        %v642 = vadd.f32 %v573, 3.0
        %v643 = vadd.f32 %v576, 3.0
        %v644 = vadd.f32 %v578, 3.0
        %v645 = vadd.f32 %v581, 3.0
        %v646 = vadd.f32 %v583, 3.0
        %v647 = vadd.f32 %v586, 3.0
        %v648 = vadd.f32 %v588, 3.0
        %v649 = vadd.f32 %v591, 3.0
        %v650 = vadd.f32 %v593, 3.0
        %v651 = vadd.f32 %v596, 3.0
        %v652 = vadd.f32 %v598, 3.0
        %v653 = vadd.f32 %v601, 3.0
        %v654 = vadd.f32 %v603, 3.0
        %v655 = vadd.f32 %v606, 3.0
        %v656 = vadd.f32 %v608, 3.0
        %v657 = vadd.f32 %v611, 3.0
        %v658 = vadd.f32 %v613, 3.0
        %v659 = vadd.f32 %v616, 3.0
        %v660 = vadd.f32 %v618, 3.0
        %v661 = vadd.f32 %v621, 3.0
        %v662 = vadd.f32 %v623, 3.0
        %v663 = vadd.f32 %v626, 3.0
        %v664 = vadd.f32 %v628, 3.0
        %v665 = vadd.f32 %v631, 3.0
        %v666 = vadd.f32 %v633, 3.0
        %v667 = vmax.f32 %v635, 0.0
        %v668 = vmax.f32 %v636, 0.0
        %v669 = vmax.f32 %v637, 0.0
        %v670 = vmax.f32 %v638, 0.0
        %v671 = vmax.f32 %v639, 0.0
        %v672 = vmax.f32 %v640, 0.0
        %v673 = vmax.f32 %v641, 0.0
        %v674 = vmax.f32 %v642, 0.0
        %v675 = vmax.f32 %v643, 0.0
        %v676 = vmax.f32 %v644, 0.0
        %v677 = vmax.f32 %v645, 0.0
        %v678 = vmax.f32 %v646, 0.0
        %v679 = vmax.f32 %v647, 0.0
        %v680 = vmax.f32 %v648, 0.0
        %v681 = vmax.f32 %v649, 0.0
        %v682 = vmax.f32 %v650, 0.0
        %v683 = vmax.f32 %v651, 0.0
        %v684 = vmax.f32 %v652, 0.0
        %v685 = vmax.f32 %v653, 0.0
        %v686 = vmax.f32 %v654, 0.0
        %v687 = vmax.f32 %v655, 0.0
        %v688 = vmax.f32 %v656, 0.0
        %v689 = vmax.f32 %v657, 0.0
        %v690 = vmax.f32 %v658, 0.0
        %v691 = vmax.f32 %v659, 0.0
        %v692 = vmax.f32 %v660, 0.0
        %v693 = vmax.f32 %v661, 0.0
        %v694 = vmax.f32 %v662, 0.0
        %v695 = vmax.f32 %v663, 0.0
        %v696 = vmax.f32 %v664, 0.0
        %v697 = vmax.f32 %v665, 0.0
        %v698 = vmax.f32 %v666, 0.0
        %v699 = vmin.f32 %v667, 6.0
        %v700 = vmin.f32 %v668, 6.0
        %v701 = vmin.f32 %v669, 6.0
        %v702 = vmin.f32 %v670, 6.0
        %v703 = vmin.f32 %v671, 6.0
        %v704 = vmin.f32 %v672, 6.0
        %v705 = vmin.f32 %v673, 6.0
        %v706 = vmin.f32 %v674, 6.0
        %v707 = vmin.f32 %v675, 6.0
        %v708 = vmin.f32 %v676, 6.0
        %v709 = vmin.f32 %v677, 6.0
        %v710 = vmin.f32 %v678, 6.0
        %v711 = vmin.f32 %v679, 6.0
        %v712 = vmin.f32 %v680, 6.0
        %v713 = vmin.f32 %v681, 6.0
        %v714 = vmin.f32 %v682, 6.0
        %v715 = vmin.f32 %v683, 6.0
        %v716 = vmin.f32 %v684, 6.0
        %v717 = vmin.f32 %v685, 6.0
        %v718 = vmin.f32 %v686, 6.0
        %v719 = vmin.f32 %v687, 6.0
        %v720 = vmin.f32 %v688, 6.0
        %v721 = vmin.f32 %v689, 6.0
        %v722 = vmin.f32 %v690, 6.0
        %v723 = vmin.f32 %v691, 6.0
        %v724 = vmin.f32 %v692, 6.0
        %v725 = vmin.f32 %v693, 6.0
        %v726 = vmin.f32 %v694, 6.0
        %v727 = vmin.f32 %v695, 6.0
        %v728 = vmin.f32 %v696, 6.0
        %v729 = vmin.f32 %v697, 6.0
        %v730 = vmin.f32 %v698, 6.0
        %v731 = vmul.f32 %v699, 0.16666667
        %v732 = vmul.f32 %v700, 0.16666667
        %v733 = vmul.f32 %v701, 0.16666667
        %v734 = vmul.f32 %v702, 0.16666667
        %v735 = vmul.f32 %v703, 0.16666667
        %v736 = vmul.f32 %v704, 0.16666667
        %v737 = vmul.f32 %v705, 0.16666667
        %v738 = vmul.f32 %v706, 0.16666667
        %v739 = vmul.f32 %v707, 0.16666667
        %v740 = vmul.f32 %v708, 0.16666667
        %v741 = vmul.f32 %v709, 0.16666667
        %v742 = vmul.f32 %v710, 0.16666667
        %v743 = vmul.f32 %v711, 0.16666667
        %v744 = vmul.f32 %v712, 0.16666667
        %v745 = vmul.f32 %v713, 0.16666667
        %v746 = vmul.f32 %v714, 0.16666667
        %v747 = vmul.f32 %v715, 0.16666667
        %v748 = vmul.f32 %v716, 0.16666667
        %v749 = vmul.f32 %v717, 0.16666667
        %v750 = vmul.f32 %v718, 0.16666667
        %v751 = vmul.f32 %v719, 0.16666667
        %v752 = vmul.f32 %v720, 0.16666667
        %v753 = vmul.f32 %v721, 0.16666667
        %v754 = vmul.f32 %v722, 0.16666667
        %v755 = vmul.f32 %v723, 0.16666667
        %v756 = vmul.f32 %v724, 0.16666667
        %v757 = vmul.f32 %v725, 0.16666667
        %v758 = vmul.f32 %v726, 0.16666667
        %v759 = vmul.f32 %v727, 0.16666667
        %v760 = vmul.f32 %v728, 0.16666667
        %v761 = vmul.f32 %v729, 0.16666667
        %v762 = vmul.f32 %v730, 0.16666667
        %v763 = vmul.f32 %v556, %v731
        %v764 = vmul.f32 %v558, %v732
        %v765 = vmul.f32 %v561, %v733
        %v766 = vmul.f32 %v563, %v734
        %v767 = vmul.f32 %v566, %v735
        %v768 = vmul.f32 %v568, %v736
        %v769 = vmul.f32 %v571, %v737
        %v770 = vmul.f32 %v573, %v738
        %v771 = vmul.f32 %v576, %v739
        %v772 = vmul.f32 %v578, %v740
        %v773 = vmul.f32 %v581, %v741
        %v774 = vmul.f32 %v583, %v742
        %v775 = vmul.f32 %v586, %v743
        %v776 = vmul.f32 %v588, %v744
        %v777 = vmul.f32 %v591, %v745
        %v778 = vmul.f32 %v593, %v746
        %v779 = vmul.f32 %v596, %v747
        %v780 = vmul.f32 %v598, %v748
        %v781 = vmul.f32 %v601, %v749
        %v782 = vmul.f32 %v603, %v750
        %v783 = vmul.f32 %v606, %v751
        %v784 = vmul.f32 %v608, %v752
        %v785 = vmul.f32 %v611, %v753
        %v786 = vmul.f32 %v613, %v754
        %v787 = vmul.f32 %v616, %v755
        %v788 = vmul.f32 %v618, %v756
        %v789 = vmul.f32 %v621, %v757
        %v790 = vmul.f32 %v623, %v758
        %v791 = vmul.f32 %v626, %v759
        %v792 = vmul.f32 %v628, %v760
        %v793 = vmul.f32 %v631, %v761
        %v794 = vmul.f32 %v633, %v762
        %795 = vst [vmem:[#allocation2] sm:$0xff] 0.0
        %796 = vst [vmem:[#allocation2 + $0x8] sm:$0xff] 0.0
        %797 = vst [vmem:[#allocation2 + $0x10] sm:$0xff] 0.0
        %798 = vst [vmem:[#allocation2 + $0x18] sm:$0x1] 0.0
        %s799 = scalar_lea.vmem [#allocation2], 544
        %800 = vst [vmem:[%s799] sm:$0xff] 0.0
        %801 = vst [vmem:[%s799 + $0x8] sm:$0xff] 0.0
        %802 = vst [vmem:[%s799 + $0x10] sm:$0xff] 0.0
        %803 = vst [vmem:[%s799 + $0x18] sm:$0x1] 0.0
        %s804 = scalar_lea.vmem [#allocation2], 32
        %805 = vst [vmem:[%s804] sm:$0xff] 0.0
        %806 = vst [vmem:[%s804 + $0x20] sm:$0xff] 0.0
        %807 = vst [vmem:[%s804 + $0x40] sm:$0xff] 0.0
        %808 = vst [vmem:[%s804 + $0x60] sm:$0xff] 0.0
        %809 = vst [vmem:[%s804 + $0x80] sm:$0xff] 0.0
        %810 = vst [vmem:[%s804 + $0xa0] sm:$0xff] 0.0
        %811 = vst [vmem:[%s804 + $0xc0] sm:$0xff] 0.0
        %812 = vst [vmem:[%s804 + $0xe0] sm:$0xff] 0.0
        %813 = vst [vmem:[%s804 + $0x100] sm:$0xff] 0.0
        %814 = vst [vmem:[%s804 + $0x120] sm:$0xff] 0.0
        %815 = vst [vmem:[%s804 + $0x140] sm:$0xff] 0.0
        %816 = vst [vmem:[%s804 + $0x160] sm:$0xff] 0.0
        %817 = vst [vmem:[%s804 + $0x180] sm:$0xff] 0.0
        %818 = vst [vmem:[%s804 + $0x1a0] sm:$0xff] 0.0
        %819 = vst [vmem:[%s804 + $0x1c0] sm:$0xff] 0.0
        %820 = vst [vmem:[%s804 + $0x1e0] sm:$0xff] 0.0
        %821 = vst [vmem:[%s804 + $0x18] sm:$0x1] 0.0
        %822 = vst [vmem:[%s804 + $0x38] sm:$0x1] 0.0
        %823 = vst [vmem:[%s804 + $0x58] sm:$0x1] 0.0
        %824 = vst [vmem:[%s804 + $0x78] sm:$0x1] 0.0
        %825 = vst [vmem:[%s804 + $0x98] sm:$0x1] 0.0
        %826 = vst [vmem:[%s804 + $0xb8] sm:$0x1] 0.0
        %827 = vst [vmem:[%s804 + $0xd8] sm:$0x1] 0.0
        %828 = vst [vmem:[%s804 + $0xf8] sm:$0x1] 0.0
        %829 = vst [vmem:[%s804 + $0x118] sm:$0x1] 0.0
        %830 = vst [vmem:[%s804 + $0x138] sm:$0x1] 0.0
        %831 = vst [vmem:[%s804 + $0x158] sm:$0x1] 0.0
        %832 = vst [vmem:[%s804 + $0x178] sm:$0x1] 0.0
        %833 = vst [vmem:[%s804 + $0x198] sm:$0x1] 0.0
        %834 = vst [vmem:[%s804 + $0x1b8] sm:$0x1] 0.0
        %835 = vst [vmem:[%s804 + $0x1d8] sm:$0x1] 0.0
        %836 = vst [vmem:[%s804 + $0x1f8] sm:$0x1] 0.0
        %837 = vst [vmem:[%s804 + $0x8] sm:$0xff] %v763
        %838 = vst [vmem:[%s804 + $0x10] sm:$0xff] %v764
        %839 = vst [vmem:[%s804 + $0x28] sm:$0xff] %v765
        %840 = vst [vmem:[%s804 + $0x30] sm:$0xff] %v766
        %841 = vst [vmem:[%s804 + $0x48] sm:$0xff] %v767
        %842 = vst [vmem:[%s804 + $0x50] sm:$0xff] %v768
        %843 = vst [vmem:[%s804 + $0x68] sm:$0xff] %v769
        %844 = vst [vmem:[%s804 + $0x70] sm:$0xff] %v770
        %845 = vst [vmem:[%s804 + $0x88] sm:$0xff] %v771
        %846 = vst [vmem:[%s804 + $0x90] sm:$0xff] %v772
        %847 = vst [vmem:[%s804 + $0xa8] sm:$0xff] %v773
        %848 = vst [vmem:[%s804 + $0xb0] sm:$0xff] %v774
        %849 = vst [vmem:[%s804 + $0xc8] sm:$0xff] %v775
        %850 = vst [vmem:[%s804 + $0xd0] sm:$0xff] %v776
        %851 = vst [vmem:[%s804 + $0xe8] sm:$0xff] %v777
        %852 = vst [vmem:[%s804 + $0xf0] sm:$0xff] %v778
        %853 = vst [vmem:[%s804 + $0x108] sm:$0xff] %v779
        %854 = vst [vmem:[%s804 + $0x110] sm:$0xff] %v780
        %855 = vst [vmem:[%s804 + $0x128] sm:$0xff] %v781
        %856 = vst [vmem:[%s804 + $0x130] sm:$0xff] %v782
        %857 = vst [vmem:[%s804 + $0x148] sm:$0xff] %v783
        %858 = vst [vmem:[%s804 + $0x150] sm:$0xff] %v784
        %859 = vst [vmem:[%s804 + $0x168] sm:$0xff] %v785
        %860 = vst [vmem:[%s804 + $0x170] sm:$0xff] %v786
        %861 = vst [vmem:[%s804 + $0x188] sm:$0xff] %v787
        %862 = vst [vmem:[%s804 + $0x190] sm:$0xff] %v788
        %863 = vst [vmem:[%s804 + $0x1a8] sm:$0xff] %v789
        %864 = vst [vmem:[%s804 + $0x1b0] sm:$0xff] %v790
        %865 = vst [vmem:[%s804 + $0x1c8] sm:$0xff] %v791
        %866 = vst [vmem:[%s804 + $0x1d0] sm:$0xff] %v792
        %867 = vst [vmem:[%s804 + $0x1e8] sm:$0xff] %v793
        %868 = vst [vmem:[%s804 + $0x1f0] sm:$0xff] %v794
        %v869 = vld [vmem:[#allocation2 + $0x7] sm:$0xff]
        %v870 = vld [vmem:[#allocation2 + $0xf] sm:$0xff]
        %v871 = vld [vmem:[#allocation2 + $0x27] sm:$0xff]
        %v872 = vld [vmem:[#allocation2 + $0x2f] sm:$0xff]
        %v873 = vld [vmem:[#allocation2 + $0x47] sm:$0xff]
        %v874 = vld [vmem:[#allocation2 + $0x4f] sm:$0xff]
        %v875 = vld [vmem:[#allocation2 + $0x67] sm:$0xff]
        %v876 = vld [vmem:[#allocation2 + $0x6f] sm:$0xff]
        %v877 = vld [vmem:[#allocation2 + $0x87] sm:$0xff]
        %v878 = vld [vmem:[#allocation2 + $0x8f] sm:$0xff]
        %v879 = vld [vmem:[#allocation2 + $0xa7] sm:$0xff]
        %v880 = vld [vmem:[#allocation2 + $0xaf] sm:$0xff]
        %v881 = vld [vmem:[#allocation2 + $0xc7] sm:$0xff]
        %v882 = vld [vmem:[#allocation2 + $0xcf] sm:$0xff]
        %v883 = vld [vmem:[#allocation2 + $0xe7] sm:$0xff]
        %v884 = vld [vmem:[#allocation2 + $0xef] sm:$0xff]
        %v885 = vld [vmem:[#allocation2 + $0x107] sm:$0xff]
        %v886 = vld [vmem:[#allocation2 + $0x10f] sm:$0xff]
        %v887 = vld [vmem:[#allocation2 + $0x127] sm:$0xff]
        %v888 = vld [vmem:[#allocation2 + $0x12f] sm:$0xff]
        %v889 = vld [vmem:[#allocation2 + $0x147] sm:$0xff]
        %v890 = vld [vmem:[#allocation2 + $0x14f] sm:$0xff]
        %v891 = vld [vmem:[#allocation2 + $0x167] sm:$0xff]
        %v892 = vld [vmem:[#allocation2 + $0x16f] sm:$0xff]
        %v893 = vld [vmem:[#allocation2 + $0x187] sm:$0xff]
        %v894 = vld [vmem:[#allocation2 + $0x18f] sm:$0xff]
        %v895 = vld [vmem:[#allocation2 + $0x1a7] sm:$0xff]
        %v896 = vld [vmem:[#allocation2 + $0x1af] sm:$0xff]
        %v897 = vld [vmem:[#allocation2 + $0x1c7] sm:$0xff]
        %v898 = vld [vmem:[#allocation2 + $0x1cf] sm:$0xff]
        %v899 = vld [vmem:[#allocation2 + $0x1e7] sm:$0xff]
        %v900 = vld [vmem:[#allocation2 + $0x1ef] sm:$0xff]
        %v901 = vld [vmem:[%s3] sm:$0x1]
        %v902 = vperm.slane %v901, 0
        %v903 = vmul.f32 %v869, %v902
        %v904 = vmul.f32 %v870, %v902
        %v905 = vmul.f32 %v871, %v902
        %v906 = vmul.f32 %v872, %v902
        %v907 = vmul.f32 %v873, %v902
        %v908 = vmul.f32 %v874, %v902
        %v909 = vmul.f32 %v875, %v902
        %v910 = vmul.f32 %v876, %v902
        %v911 = vmul.f32 %v877, %v902
        %v912 = vmul.f32 %v878, %v902
        %v913 = vmul.f32 %v879, %v902
        %v914 = vmul.f32 %v880, %v902
        %v915 = vmul.f32 %v881, %v902
        %v916 = vmul.f32 %v882, %v902
        %v917 = vmul.f32 %v883, %v902
        %v918 = vmul.f32 %v884, %v902
        %v919 = vmul.f32 %v885, %v902
        %v920 = vmul.f32 %v886, %v902
        %v921 = vmul.f32 %v887, %v902
        %v922 = vmul.f32 %v888, %v902
        %v923 = vmul.f32 %v889, %v902
        %v924 = vmul.f32 %v890, %v902
        %v925 = vmul.f32 %v891, %v902
        %v926 = vmul.f32 %v892, %v902
        %v927 = vmul.f32 %v893, %v902
        %v928 = vmul.f32 %v894, %v902
        %v929 = vmul.f32 %v895, %v902
        %v930 = vmul.f32 %v896, %v902
        %v931 = vmul.f32 %v897, %v902
        %v932 = vmul.f32 %v898, %v902
        %v933 = vmul.f32 %v899, %v902
        %v934 = vmul.f32 %v900, %v902
        %v935 = vadd.f32 %v903, 0.0
        %v936 = vadd.f32 %v904, 0.0
        %v937 = vadd.f32 %v905, 0.0
        %v938 = vadd.f32 %v906, 0.0
        %v939 = vadd.f32 %v907, 0.0
        %v940 = vadd.f32 %v908, 0.0
        %v941 = vadd.f32 %v909, 0.0
        %v942 = vadd.f32 %v910, 0.0
        %v943 = vadd.f32 %v911, 0.0
        %v944 = vadd.f32 %v912, 0.0
        %v945 = vadd.f32 %v913, 0.0
        %v946 = vadd.f32 %v914, 0.0
        %v947 = vadd.f32 %v915, 0.0
        %v948 = vadd.f32 %v916, 0.0
        %v949 = vadd.f32 %v917, 0.0
        %v950 = vadd.f32 %v918, 0.0
        %v951 = vadd.f32 %v919, 0.0
        %v952 = vadd.f32 %v920, 0.0
        %v953 = vadd.f32 %v921, 0.0
        %v954 = vadd.f32 %v922, 0.0
        %v955 = vadd.f32 %v923, 0.0
        %v956 = vadd.f32 %v924, 0.0
        %v957 = vadd.f32 %v925, 0.0
        %v958 = vadd.f32 %v926, 0.0
        %v959 = vadd.f32 %v927, 0.0
        %v960 = vadd.f32 %v928, 0.0
        %v961 = vadd.f32 %v929, 0.0
        %v962 = vadd.f32 %v930, 0.0
        %v963 = vadd.f32 %v931, 0.0
        %v964 = vadd.f32 %v932, 0.0
        %v965 = vadd.f32 %v933, 0.0
        %v966 = vadd.f32 %v934, 0.0
        %v967 = vld [vmem:[#allocation2 + $0x8] sm:$0xff]
        %v968 = vld [vmem:[#allocation2 + $0x10] sm:$0xff]
        %v969 = vld [vmem:[#allocation2 + $0x28] sm:$0xff]
        %v970 = vld [vmem:[#allocation2 + $0x30] sm:$0xff]
        %v971 = vld [vmem:[#allocation2 + $0x48] sm:$0xff]
        %v972 = vld [vmem:[#allocation2 + $0x50] sm:$0xff]
        %v973 = vld [vmem:[#allocation2 + $0x68] sm:$0xff]
        %v974 = vld [vmem:[#allocation2 + $0x70] sm:$0xff]
        %v975 = vld [vmem:[#allocation2 + $0x88] sm:$0xff]
        %v976 = vld [vmem:[#allocation2 + $0x90] sm:$0xff]
        %v977 = vld [vmem:[#allocation2 + $0xa8] sm:$0xff]
        %v978 = vld [vmem:[#allocation2 + $0xb0] sm:$0xff]
        %v979 = vld [vmem:[#allocation2 + $0xc8] sm:$0xff]
        %v980 = vld [vmem:[#allocation2 + $0xd0] sm:$0xff]
        %v981 = vld [vmem:[#allocation2 + $0xe8] sm:$0xff]
        %v982 = vld [vmem:[#allocation2 + $0xf0] sm:$0xff]
        %v983 = vld [vmem:[#allocation2 + $0x108] sm:$0xff]
        %v984 = vld [vmem:[#allocation2 + $0x110] sm:$0xff]
        %v985 = vld [vmem:[#allocation2 + $0x128] sm:$0xff]
        %v986 = vld [vmem:[#allocation2 + $0x130] sm:$0xff]
        %v987 = vld [vmem:[#allocation2 + $0x148] sm:$0xff]
        %v988 = vld [vmem:[#allocation2 + $0x150] sm:$0xff]
        %v989 = vld [vmem:[#allocation2 + $0x168] sm:$0xff]
        %v990 = vld [vmem:[#allocation2 + $0x170] sm:$0xff]
        %v991 = vld [vmem:[#allocation2 + $0x188] sm:$0xff]
        %v992 = vld [vmem:[#allocation2 + $0x190] sm:$0xff]
        %v993 = vld [vmem:[#allocation2 + $0x1a8] sm:$0xff]
        %v994 = vld [vmem:[#allocation2 + $0x1b0] sm:$0xff]
        %v995 = vld [vmem:[#allocation2 + $0x1c8] sm:$0xff]
        %v996 = vld [vmem:[#allocation2 + $0x1d0] sm:$0xff]
        %v997 = vld [vmem:[#allocation2 + $0x1e8] sm:$0xff]
        %v998 = vld [vmem:[#allocation2 + $0x1f0] sm:$0xff]
        %v999 = vld [vmem:[%s3 + $0x1] sm:$0x1]
        %v1000 = vperm.slane %v999, 0
        %v1001 = vmul.f32 %v967, %v1000
        %v1002 = vmul.f32 %v968, %v1000
        %v1003 = vmul.f32 %v969, %v1000
        %v1004 = vmul.f32 %v970, %v1000
        %v1005 = vmul.f32 %v971, %v1000
        %v1006 = vmul.f32 %v972, %v1000
        %v1007 = vmul.f32 %v973, %v1000
        %v1008 = vmul.f32 %v974, %v1000
        %v1009 = vmul.f32 %v975, %v1000
        %v1010 = vmul.f32 %v976, %v1000
        %v1011 = vmul.f32 %v977, %v1000
        %v1012 = vmul.f32 %v978, %v1000
        %v1013 = vmul.f32 %v979, %v1000
        %v1014 = vmul.f32 %v980, %v1000
        %v1015 = vmul.f32 %v981, %v1000
        %v1016 = vmul.f32 %v982, %v1000
        %v1017 = vmul.f32 %v983, %v1000
        %v1018 = vmul.f32 %v984, %v1000
        %v1019 = vmul.f32 %v985, %v1000
        %v1020 = vmul.f32 %v986, %v1000
        %v1021 = vmul.f32 %v987, %v1000
        %v1022 = vmul.f32 %v988, %v1000
        %v1023 = vmul.f32 %v989, %v1000
        %v1024 = vmul.f32 %v990, %v1000
        %v1025 = vmul.f32 %v991, %v1000
        %v1026 = vmul.f32 %v992, %v1000
        %v1027 = vmul.f32 %v993, %v1000
        %v1028 = vmul.f32 %v994, %v1000
        %v1029 = vmul.f32 %v995, %v1000
        %v1030 = vmul.f32 %v996, %v1000
        %v1031 = vmul.f32 %v997, %v1000
        %v1032 = vmul.f32 %v998, %v1000
        %v1033 = vadd.f32 %v935, %v1001
        %v1034 = vadd.f32 %v936, %v1002
        %v1035 = vadd.f32 %v937, %v1003
        %v1036 = vadd.f32 %v938, %v1004
        %v1037 = vadd.f32 %v939, %v1005
        %v1038 = vadd.f32 %v940, %v1006
        %v1039 = vadd.f32 %v941, %v1007
        %v1040 = vadd.f32 %v942, %v1008
        %v1041 = vadd.f32 %v943, %v1009
        %v1042 = vadd.f32 %v944, %v1010
        %v1043 = vadd.f32 %v945, %v1011
        %v1044 = vadd.f32 %v946, %v1012
        %v1045 = vadd.f32 %v947, %v1013
        %v1046 = vadd.f32 %v948, %v1014
        %v1047 = vadd.f32 %v949, %v1015
        %v1048 = vadd.f32 %v950, %v1016
        %v1049 = vadd.f32 %v951, %v1017
        %v1050 = vadd.f32 %v952, %v1018
        %v1051 = vadd.f32 %v953, %v1019
        %v1052 = vadd.f32 %v954, %v1020
        %v1053 = vadd.f32 %v955, %v1021
        %v1054 = vadd.f32 %v956, %v1022
        %v1055 = vadd.f32 %v957, %v1023
        %v1056 = vadd.f32 %v958, %v1024
        %v1057 = vadd.f32 %v959, %v1025
        %v1058 = vadd.f32 %v960, %v1026
        %v1059 = vadd.f32 %v961, %v1027
        %v1060 = vadd.f32 %v962, %v1028
        %v1061 = vadd.f32 %v963, %v1029
        %v1062 = vadd.f32 %v964, %v1030
        %v1063 = vadd.f32 %v965, %v1031
        %v1064 = vadd.f32 %v966, %v1032
        %v1065 = vld [vmem:[#allocation2 + $0x9] sm:$0xff]
        %v1066 = vld [vmem:[#allocation2 + $0x11] sm:$0xff]
        %v1067 = vld [vmem:[#allocation2 + $0x29] sm:$0xff]
        %v1068 = vld [vmem:[#allocation2 + $0x31] sm:$0xff]
        %v1069 = vld [vmem:[#allocation2 + $0x49] sm:$0xff]
        %v1070 = vld [vmem:[#allocation2 + $0x51] sm:$0xff]
        %v1071 = vld [vmem:[#allocation2 + $0x69] sm:$0xff]
        %v1072 = vld [vmem:[#allocation2 + $0x71] sm:$0xff]
        %v1073 = vld [vmem:[#allocation2 + $0x89] sm:$0xff]
        %v1074 = vld [vmem:[#allocation2 + $0x91] sm:$0xff]
        %v1075 = vld [vmem:[#allocation2 + $0xa9] sm:$0xff]
        %v1076 = vld [vmem:[#allocation2 + $0xb1] sm:$0xff]
        %v1077 = vld [vmem:[#allocation2 + $0xc9] sm:$0xff]
        %v1078 = vld [vmem:[#allocation2 + $0xd1] sm:$0xff]
        %v1079 = vld [vmem:[#allocation2 + $0xe9] sm:$0xff]
        %v1080 = vld [vmem:[#allocation2 + $0xf1] sm:$0xff]
        %v1081 = vld [vmem:[#allocation2 + $0x109] sm:$0xff]
        %v1082 = vld [vmem:[#allocation2 + $0x111] sm:$0xff]
        %v1083 = vld [vmem:[#allocation2 + $0x129] sm:$0xff]
        %v1084 = vld [vmem:[#allocation2 + $0x131] sm:$0xff]
        %v1085 = vld [vmem:[#allocation2 + $0x149] sm:$0xff]
        %v1086 = vld [vmem:[#allocation2 + $0x151] sm:$0xff]
        %v1087 = vld [vmem:[#allocation2 + $0x169] sm:$0xff]
        %v1088 = vld [vmem:[#allocation2 + $0x171] sm:$0xff]
        %v1089 = vld [vmem:[#allocation2 + $0x189] sm:$0xff]
        %v1090 = vld [vmem:[#allocation2 + $0x191] sm:$0xff]
        %v1091 = vld [vmem:[#allocation2 + $0x1a9] sm:$0xff]
        %v1092 = vld [vmem:[#allocation2 + $0x1b1] sm:$0xff]
        %v1093 = vld [vmem:[#allocation2 + $0x1c9] sm:$0xff]
        %v1094 = vld [vmem:[#allocation2 + $0x1d1] sm:$0xff]
        %v1095 = vld [vmem:[#allocation2 + $0x1e9] sm:$0xff]
        %v1096 = vld [vmem:[#allocation2 + $0x1f1] sm:$0xff]
        %v1097 = vld [vmem:[%s3 + $0x2] sm:$0x1]
        %v1098 = vperm.slane %v1097, 0
        %v1099 = vmul.f32 %v1065, %v1098
        %v1100 = vmul.f32 %v1066, %v1098
        %v1101 = vmul.f32 %v1067, %v1098
        %v1102 = vmul.f32 %v1068, %v1098
        %v1103 = vmul.f32 %v1069, %v1098
        %v1104 = vmul.f32 %v1070, %v1098
        %v1105 = vmul.f32 %v1071, %v1098
        %v1106 = vmul.f32 %v1072, %v1098
        %v1107 = vmul.f32 %v1073, %v1098
        %v1108 = vmul.f32 %v1074, %v1098
        %v1109 = vmul.f32 %v1075, %v1098
        %v1110 = vmul.f32 %v1076, %v1098
        %v1111 = vmul.f32 %v1077, %v1098
        %v1112 = vmul.f32 %v1078, %v1098
        %v1113 = vmul.f32 %v1079, %v1098
        %v1114 = vmul.f32 %v1080, %v1098
        %v1115 = vmul.f32 %v1081, %v1098
        %v1116 = vmul.f32 %v1082, %v1098
        %v1117 = vmul.f32 %v1083, %v1098
        %v1118 = vmul.f32 %v1084, %v1098
        %v1119 = vmul.f32 %v1085, %v1098
        %v1120 = vmul.f32 %v1086, %v1098
        %v1121 = vmul.f32 %v1087, %v1098
        %v1122 = vmul.f32 %v1088, %v1098
        %v1123 = vmul.f32 %v1089, %v1098
        %v1124 = vmul.f32 %v1090, %v1098
        %v1125 = vmul.f32 %v1091, %v1098
        %v1126 = vmul.f32 %v1092, %v1098
        %v1127 = vmul.f32 %v1093, %v1098
        %v1128 = vmul.f32 %v1094, %v1098
        %v1129 = vmul.f32 %v1095, %v1098
        %v1130 = vmul.f32 %v1096, %v1098
        %v1131 = vadd.f32 %v1033, %v1099
        %v1132 = vadd.f32 %v1034, %v1100
        %v1133 = vadd.f32 %v1035, %v1101
        %v1134 = vadd.f32 %v1036, %v1102
        %v1135 = vadd.f32 %v1037, %v1103
        %v1136 = vadd.f32 %v1038, %v1104
        %v1137 = vadd.f32 %v1039, %v1105
        %v1138 = vadd.f32 %v1040, %v1106
        %v1139 = vadd.f32 %v1041, %v1107
        %v1140 = vadd.f32 %v1042, %v1108
        %v1141 = vadd.f32 %v1043, %v1109
        %v1142 = vadd.f32 %v1044, %v1110
        %v1143 = vadd.f32 %v1045, %v1111
        %v1144 = vadd.f32 %v1046, %v1112
        %v1145 = vadd.f32 %v1047, %v1113
        %v1146 = vadd.f32 %v1048, %v1114
        %v1147 = vadd.f32 %v1049, %v1115
        %v1148 = vadd.f32 %v1050, %v1116
        %v1149 = vadd.f32 %v1051, %v1117
        %v1150 = vadd.f32 %v1052, %v1118
        %v1151 = vadd.f32 %v1053, %v1119
        %v1152 = vadd.f32 %v1054, %v1120
        %v1153 = vadd.f32 %v1055, %v1121
        %v1154 = vadd.f32 %v1056, %v1122
        %v1155 = vadd.f32 %v1057, %v1123
        %v1156 = vadd.f32 %v1058, %v1124
        %v1157 = vadd.f32 %v1059, %v1125
        %v1158 = vadd.f32 %v1060, %v1126
        %v1159 = vadd.f32 %v1061, %v1127
        %v1160 = vadd.f32 %v1062, %v1128
        %v1161 = vadd.f32 %v1063, %v1129
        %v1162 = vadd.f32 %v1064, %v1130
        %v1163 = vld [vmem:[%s804 + $0x7] sm:$0xff]
        %v1164 = vld [vmem:[%s804 + $0xf] sm:$0xff]
        %v1165 = vld [vmem:[%s804 + $0x27] sm:$0xff]
        %v1166 = vld [vmem:[%s804 + $0x2f] sm:$0xff]
        %v1167 = vld [vmem:[%s804 + $0x47] sm:$0xff]
        %v1168 = vld [vmem:[%s804 + $0x4f] sm:$0xff]
        %v1169 = vld [vmem:[%s804 + $0x67] sm:$0xff]
        %v1170 = vld [vmem:[%s804 + $0x6f] sm:$0xff]
        %v1171 = vld [vmem:[%s804 + $0x87] sm:$0xff]
        %v1172 = vld [vmem:[%s804 + $0x8f] sm:$0xff]
        %v1173 = vld [vmem:[%s804 + $0xa7] sm:$0xff]
        %v1174 = vld [vmem:[%s804 + $0xaf] sm:$0xff]
        %v1175 = vld [vmem:[%s804 + $0xc7] sm:$0xff]
        %v1176 = vld [vmem:[%s804 + $0xcf] sm:$0xff]
        %v1177 = vld [vmem:[%s804 + $0xe7] sm:$0xff]
        %v1178 = vld [vmem:[%s804 + $0xef] sm:$0xff]
        %v1179 = vld [vmem:[%s804 + $0x107] sm:$0xff]
        %v1180 = vld [vmem:[%s804 + $0x10f] sm:$0xff]
        %v1181 = vld [vmem:[%s804 + $0x127] sm:$0xff]
        %v1182 = vld [vmem:[%s804 + $0x12f] sm:$0xff]
        %v1183 = vld [vmem:[%s804 + $0x147] sm:$0xff]
        %v1184 = vld [vmem:[%s804 + $0x14f] sm:$0xff]
        %v1185 = vld [vmem:[%s804 + $0x167] sm:$0xff]
        %v1186 = vld [vmem:[%s804 + $0x16f] sm:$0xff]
        %v1187 = vld [vmem:[%s804 + $0x187] sm:$0xff]
        %v1188 = vld [vmem:[%s804 + $0x18f] sm:$0xff]
        %v1189 = vld [vmem:[%s804 + $0x1a7] sm:$0xff]
        %v1190 = vld [vmem:[%s804 + $0x1af] sm:$0xff]
        %v1191 = vld [vmem:[%s804 + $0x1c7] sm:$0xff]
        %v1192 = vld [vmem:[%s804 + $0x1cf] sm:$0xff]
        %v1193 = vld [vmem:[%s804 + $0x1e7] sm:$0xff]
        %v1194 = vld [vmem:[%s804 + $0x1ef] sm:$0xff]
        %v1195 = vld [vmem:[%s3 + $0x3] sm:$0x1]
        %v1196 = vperm.slane %v1195, 0
        %v1197 = vmul.f32 %v1163, %v1196
        %v1198 = vmul.f32 %v1164, %v1196
        %v1199 = vmul.f32 %v1165, %v1196
        %v1200 = vmul.f32 %v1166, %v1196
        %v1201 = vmul.f32 %v1167, %v1196
        %v1202 = vmul.f32 %v1168, %v1196
        %v1203 = vmul.f32 %v1169, %v1196
        %v1204 = vmul.f32 %v1170, %v1196
        %v1205 = vmul.f32 %v1171, %v1196
        %v1206 = vmul.f32 %v1172, %v1196
        %v1207 = vmul.f32 %v1173, %v1196
        %v1208 = vmul.f32 %v1174, %v1196
        %v1209 = vmul.f32 %v1175, %v1196
        %v1210 = vmul.f32 %v1176, %v1196
        %v1211 = vmul.f32 %v1177, %v1196
        %v1212 = vmul.f32 %v1178, %v1196
        %v1213 = vmul.f32 %v1179, %v1196
        %v1214 = vmul.f32 %v1180, %v1196
        %v1215 = vmul.f32 %v1181, %v1196
        %v1216 = vmul.f32 %v1182, %v1196
        %v1217 = vmul.f32 %v1183, %v1196
        %v1218 = vmul.f32 %v1184, %v1196
        %v1219 = vmul.f32 %v1185, %v1196
        %v1220 = vmul.f32 %v1186, %v1196
        %v1221 = vmul.f32 %v1187, %v1196
        %v1222 = vmul.f32 %v1188, %v1196
        %v1223 = vmul.f32 %v1189, %v1196
        %v1224 = vmul.f32 %v1190, %v1196
        %v1225 = vmul.f32 %v1191, %v1196
        %v1226 = vmul.f32 %v1192, %v1196
        %v1227 = vmul.f32 %v1193, %v1196
        %v1228 = vmul.f32 %v1194, %v1196
        %v1229 = vadd.f32 %v1131, %v1197
        %v1230 = vadd.f32 %v1132, %v1198
        %v1231 = vadd.f32 %v1133, %v1199
        %v1232 = vadd.f32 %v1134, %v1200
        %v1233 = vadd.f32 %v1135, %v1201
        %v1234 = vadd.f32 %v1136, %v1202
        %v1235 = vadd.f32 %v1137, %v1203
        %v1236 = vadd.f32 %v1138, %v1204
        %v1237 = vadd.f32 %v1139, %v1205
        %v1238 = vadd.f32 %v1140, %v1206
        %v1239 = vadd.f32 %v1141, %v1207
        %v1240 = vadd.f32 %v1142, %v1208
        %v1241 = vadd.f32 %v1143, %v1209
        %v1242 = vadd.f32 %v1144, %v1210
        %v1243 = vadd.f32 %v1145, %v1211
        %v1244 = vadd.f32 %v1146, %v1212
        %v1245 = vadd.f32 %v1147, %v1213
        %v1246 = vadd.f32 %v1148, %v1214
        %v1247 = vadd.f32 %v1149, %v1215
        %v1248 = vadd.f32 %v1150, %v1216
        %v1249 = vadd.f32 %v1151, %v1217
        %v1250 = vadd.f32 %v1152, %v1218
        %v1251 = vadd.f32 %v1153, %v1219
        %v1252 = vadd.f32 %v1154, %v1220
        %v1253 = vadd.f32 %v1155, %v1221
        %v1254 = vadd.f32 %v1156, %v1222
        %v1255 = vadd.f32 %v1157, %v1223
        %v1256 = vadd.f32 %v1158, %v1224
        %v1257 = vadd.f32 %v1159, %v1225
        %v1258 = vadd.f32 %v1160, %v1226
        %v1259 = vadd.f32 %v1161, %v1227
        %v1260 = vadd.f32 %v1162, %v1228
        %v1261 = vld [vmem:[%s804 + $0x8] sm:$0xff]
        %v1262 = vld [vmem:[%s804 + $0x10] sm:$0xff]
        %v1263 = vld [vmem:[%s804 + $0x28] sm:$0xff]
        %v1264 = vld [vmem:[%s804 + $0x30] sm:$0xff]
        %v1265 = vld [vmem:[%s804 + $0x48] sm:$0xff]
        %v1266 = vld [vmem:[%s804 + $0x50] sm:$0xff]
        %v1267 = vld [vmem:[%s804 + $0x68] sm:$0xff]
        %v1268 = vld [vmem:[%s804 + $0x70] sm:$0xff]
        %v1269 = vld [vmem:[%s804 + $0x88] sm:$0xff]
        %v1270 = vld [vmem:[%s804 + $0x90] sm:$0xff]
        %v1271 = vld [vmem:[%s804 + $0xa8] sm:$0xff]
        %v1272 = vld [vmem:[%s804 + $0xb0] sm:$0xff]
        %v1273 = vld [vmem:[%s804 + $0xc8] sm:$0xff]
        %v1274 = vld [vmem:[%s804 + $0xd0] sm:$0xff]
        %v1275 = vld [vmem:[%s804 + $0xe8] sm:$0xff]
        %v1276 = vld [vmem:[%s804 + $0xf0] sm:$0xff]
        %v1277 = vld [vmem:[%s804 + $0x108] sm:$0xff]
        %v1278 = vld [vmem:[%s804 + $0x110] sm:$0xff]
        %v1279 = vld [vmem:[%s804 + $0x128] sm:$0xff]
        %v1280 = vld [vmem:[%s804 + $0x130] sm:$0xff]
        %v1281 = vld [vmem:[%s804 + $0x148] sm:$0xff]
        %v1282 = vld [vmem:[%s804 + $0x150] sm:$0xff]
        %v1283 = vld [vmem:[%s804 + $0x168] sm:$0xff]
        %v1284 = vld [vmem:[%s804 + $0x170] sm:$0xff]
        %v1285 = vld [vmem:[%s804 + $0x188] sm:$0xff]
        %v1286 = vld [vmem:[%s804 + $0x190] sm:$0xff]
        %v1287 = vld [vmem:[%s804 + $0x1a8] sm:$0xff]
        %v1288 = vld [vmem:[%s804 + $0x1b0] sm:$0xff]
        %v1289 = vld [vmem:[%s804 + $0x1c8] sm:$0xff]
        %v1290 = vld [vmem:[%s804 + $0x1d0] sm:$0xff]
        %v1291 = vld [vmem:[%s804 + $0x1e8] sm:$0xff]
        %v1292 = vld [vmem:[%s804 + $0x1f0] sm:$0xff]
        %v1293 = vld [vmem:[%s3 + $0x4] sm:$0x1]
        %v1294 = vperm.slane %v1293, 0
        %v1295 = vmul.f32 %v1261, %v1294
        %v1296 = vmul.f32 %v1262, %v1294
        %v1297 = vmul.f32 %v1263, %v1294
        %v1298 = vmul.f32 %v1264, %v1294
        %v1299 = vmul.f32 %v1265, %v1294
        %v1300 = vmul.f32 %v1266, %v1294
        %v1301 = vmul.f32 %v1267, %v1294
        %v1302 = vmul.f32 %v1268, %v1294
        %v1303 = vmul.f32 %v1269, %v1294
        %v1304 = vmul.f32 %v1270, %v1294
        %v1305 = vmul.f32 %v1271, %v1294
        %v1306 = vmul.f32 %v1272, %v1294
        %v1307 = vmul.f32 %v1273, %v1294
        %v1308 = vmul.f32 %v1274, %v1294
        %v1309 = vmul.f32 %v1275, %v1294
        %v1310 = vmul.f32 %v1276, %v1294
        %v1311 = vmul.f32 %v1277, %v1294
        %v1312 = vmul.f32 %v1278, %v1294
        %v1313 = vmul.f32 %v1279, %v1294
        %v1314 = vmul.f32 %v1280, %v1294
        %v1315 = vmul.f32 %v1281, %v1294
        %v1316 = vmul.f32 %v1282, %v1294
        %v1317 = vmul.f32 %v1283, %v1294
        %v1318 = vmul.f32 %v1284, %v1294
        %v1319 = vmul.f32 %v1285, %v1294
        %v1320 = vmul.f32 %v1286, %v1294
        %v1321 = vmul.f32 %v1287, %v1294
        %v1322 = vmul.f32 %v1288, %v1294
        %v1323 = vmul.f32 %v1289, %v1294
        %v1324 = vmul.f32 %v1290, %v1294
        %v1325 = vmul.f32 %v1291, %v1294
        %v1326 = vmul.f32 %v1292, %v1294
        %v1327 = vadd.f32 %v1229, %v1295
        %v1328 = vadd.f32 %v1230, %v1296
        %v1329 = vadd.f32 %v1231, %v1297
        %v1330 = vadd.f32 %v1232, %v1298
        %v1331 = vadd.f32 %v1233, %v1299
        %v1332 = vadd.f32 %v1234, %v1300
        %v1333 = vadd.f32 %v1235, %v1301
        %v1334 = vadd.f32 %v1236, %v1302
        %v1335 = vadd.f32 %v1237, %v1303
        %v1336 = vadd.f32 %v1238, %v1304
        %v1337 = vadd.f32 %v1239, %v1305
        %v1338 = vadd.f32 %v1240, %v1306
        %v1339 = vadd.f32 %v1241, %v1307
        %v1340 = vadd.f32 %v1242, %v1308
        %v1341 = vadd.f32 %v1243, %v1309
        %v1342 = vadd.f32 %v1244, %v1310
        %v1343 = vadd.f32 %v1245, %v1311
        %v1344 = vadd.f32 %v1246, %v1312
        %v1345 = vadd.f32 %v1247, %v1313
        %v1346 = vadd.f32 %v1248, %v1314
        %v1347 = vadd.f32 %v1249, %v1315
        %v1348 = vadd.f32 %v1250, %v1316
        %v1349 = vadd.f32 %v1251, %v1317
        %v1350 = vadd.f32 %v1252, %v1318
        %v1351 = vadd.f32 %v1253, %v1319
        %v1352 = vadd.f32 %v1254, %v1320
        %v1353 = vadd.f32 %v1255, %v1321
        %v1354 = vadd.f32 %v1256, %v1322
        %v1355 = vadd.f32 %v1257, %v1323
        %v1356 = vadd.f32 %v1258, %v1324
        %v1357 = vadd.f32 %v1259, %v1325
        %v1358 = vadd.f32 %v1260, %v1326
        %v1359 = vld [vmem:[%s804 + $0x9] sm:$0xff]
        %v1360 = vld [vmem:[%s804 + $0x11] sm:$0xff]
        %v1361 = vld [vmem:[%s804 + $0x29] sm:$0xff]
        %v1362 = vld [vmem:[%s804 + $0x31] sm:$0xff]
        %v1363 = vld [vmem:[%s804 + $0x49] sm:$0xff]
        %v1364 = vld [vmem:[%s804 + $0x51] sm:$0xff]
        %v1365 = vld [vmem:[%s804 + $0x69] sm:$0xff]
        %v1366 = vld [vmem:[%s804 + $0x71] sm:$0xff]
        %v1367 = vld [vmem:[%s804 + $0x89] sm:$0xff]
        %v1368 = vld [vmem:[%s804 + $0x91] sm:$0xff]
        %v1369 = vld [vmem:[%s804 + $0xa9] sm:$0xff]
        %v1370 = vld [vmem:[%s804 + $0xb1] sm:$0xff]
        %v1371 = vld [vmem:[%s804 + $0xc9] sm:$0xff]
        %v1372 = vld [vmem:[%s804 + $0xd1] sm:$0xff]
        %v1373 = vld [vmem:[%s804 + $0xe9] sm:$0xff]
        %v1374 = vld [vmem:[%s804 + $0xf1] sm:$0xff]
        %v1375 = vld [vmem:[%s804 + $0x109] sm:$0xff]
        %v1376 = vld [vmem:[%s804 + $0x111] sm:$0xff]
        %v1377 = vld [vmem:[%s804 + $0x129] sm:$0xff]
        %v1378 = vld [vmem:[%s804 + $0x131] sm:$0xff]
        %v1379 = vld [vmem:[%s804 + $0x149] sm:$0xff]
        %v1380 = vld [vmem:[%s804 + $0x151] sm:$0xff]
        %v1381 = vld [vmem:[%s804 + $0x169] sm:$0xff]
        %v1382 = vld [vmem:[%s804 + $0x171] sm:$0xff]
        %v1383 = vld [vmem:[%s804 + $0x189] sm:$0xff]
        %v1384 = vld [vmem:[%s804 + $0x191] sm:$0xff]
        %v1385 = vld [vmem:[%s804 + $0x1a9] sm:$0xff]
        %v1386 = vld [vmem:[%s804 + $0x1b1] sm:$0xff]
        %v1387 = vld [vmem:[%s804 + $0x1c9] sm:$0xff]
        %v1388 = vld [vmem:[%s804 + $0x1d1] sm:$0xff]
        %v1389 = vld [vmem:[%s804 + $0x1e9] sm:$0xff]
        %v1390 = vld [vmem:[%s804 + $0x1f1] sm:$0xff]
        %v1391 = vld [vmem:[%s3 + $0x5] sm:$0x1]
        %v1392 = vperm.slane %v1391, 0
        %v1393 = vmul.f32 %v1359, %v1392
        %v1394 = vmul.f32 %v1360, %v1392
        %v1395 = vmul.f32 %v1361, %v1392
        %v1396 = vmul.f32 %v1362, %v1392
        %v1397 = vmul.f32 %v1363, %v1392
        %v1398 = vmul.f32 %v1364, %v1392
        %v1399 = vmul.f32 %v1365, %v1392
        %v1400 = vmul.f32 %v1366, %v1392
        %v1401 = vmul.f32 %v1367, %v1392
        %v1402 = vmul.f32 %v1368, %v1392
        %v1403 = vmul.f32 %v1369, %v1392
        %v1404 = vmul.f32 %v1370, %v1392
        %v1405 = vmul.f32 %v1371, %v1392
        %v1406 = vmul.f32 %v1372, %v1392
        %v1407 = vmul.f32 %v1373, %v1392
        %v1408 = vmul.f32 %v1374, %v1392
        %v1409 = vmul.f32 %v1375, %v1392
        %v1410 = vmul.f32 %v1376, %v1392
        %v1411 = vmul.f32 %v1377, %v1392
        %v1412 = vmul.f32 %v1378, %v1392
        %v1413 = vmul.f32 %v1379, %v1392
        %v1414 = vmul.f32 %v1380, %v1392
        %v1415 = vmul.f32 %v1381, %v1392
        %v1416 = vmul.f32 %v1382, %v1392
        %v1417 = vmul.f32 %v1383, %v1392
        %v1418 = vmul.f32 %v1384, %v1392
        %v1419 = vmul.f32 %v1385, %v1392
        %v1420 = vmul.f32 %v1386, %v1392
        %v1421 = vmul.f32 %v1387, %v1392
        %v1422 = vmul.f32 %v1388, %v1392
        %v1423 = vmul.f32 %v1389, %v1392
        %v1424 = vmul.f32 %v1390, %v1392
        %v1425 = vadd.f32 %v1327, %v1393
        %v1426 = vadd.f32 %v1328, %v1394
        %v1427 = vadd.f32 %v1329, %v1395
        %v1428 = vadd.f32 %v1330, %v1396
        %v1429 = vadd.f32 %v1331, %v1397
        %v1430 = vadd.f32 %v1332, %v1398
        %v1431 = vadd.f32 %v1333, %v1399
        %v1432 = vadd.f32 %v1334, %v1400
        %v1433 = vadd.f32 %v1335, %v1401
        %v1434 = vadd.f32 %v1336, %v1402
        %v1435 = vadd.f32 %v1337, %v1403
        %v1436 = vadd.f32 %v1338, %v1404
        %v1437 = vadd.f32 %v1339, %v1405
        %v1438 = vadd.f32 %v1340, %v1406
        %v1439 = vadd.f32 %v1341, %v1407
        %v1440 = vadd.f32 %v1342, %v1408
        %v1441 = vadd.f32 %v1343, %v1409
        %v1442 = vadd.f32 %v1344, %v1410
        %v1443 = vadd.f32 %v1345, %v1411
        %v1444 = vadd.f32 %v1346, %v1412
        %v1445 = vadd.f32 %v1347, %v1413
        %v1446 = vadd.f32 %v1348, %v1414
        %v1447 = vadd.f32 %v1349, %v1415
        %v1448 = vadd.f32 %v1350, %v1416
        %v1449 = vadd.f32 %v1351, %v1417
        %v1450 = vadd.f32 %v1352, %v1418
        %v1451 = vadd.f32 %v1353, %v1419
        %v1452 = vadd.f32 %v1354, %v1420
        %v1453 = vadd.f32 %v1355, %v1421
        %v1454 = vadd.f32 %v1356, %v1422
        %v1455 = vadd.f32 %v1357, %v1423
        %v1456 = vadd.f32 %v1358, %v1424
        %s1457 = scalar_lea.vmem [#allocation2], 64
        %v1458 = vld [vmem:[%s1457 + $0x7] sm:$0xff]
        %v1459 = vld [vmem:[%s1457 + $0xf] sm:$0xff]
        %v1460 = vld [vmem:[%s1457 + $0x27] sm:$0xff]
        %v1461 = vld [vmem:[%s1457 + $0x2f] sm:$0xff]
        %v1462 = vld [vmem:[%s1457 + $0x47] sm:$0xff]
        %v1463 = vld [vmem:[%s1457 + $0x4f] sm:$0xff]
        %v1464 = vld [vmem:[%s1457 + $0x67] sm:$0xff]
        %v1465 = vld [vmem:[%s1457 + $0x6f] sm:$0xff]
        %v1466 = vld [vmem:[%s1457 + $0x87] sm:$0xff]
        %v1467 = vld [vmem:[%s1457 + $0x8f] sm:$0xff]
        %v1468 = vld [vmem:[%s1457 + $0xa7] sm:$0xff]
        %v1469 = vld [vmem:[%s1457 + $0xaf] sm:$0xff]
        %v1470 = vld [vmem:[%s1457 + $0xc7] sm:$0xff]
        %v1471 = vld [vmem:[%s1457 + $0xcf] sm:$0xff]
        %v1472 = vld [vmem:[%s1457 + $0xe7] sm:$0xff]
        %v1473 = vld [vmem:[%s1457 + $0xef] sm:$0xff]
        %v1474 = vld [vmem:[%s1457 + $0x107] sm:$0xff]
        %v1475 = vld [vmem:[%s1457 + $0x10f] sm:$0xff]
        %v1476 = vld [vmem:[%s1457 + $0x127] sm:$0xff]
        %v1477 = vld [vmem:[%s1457 + $0x12f] sm:$0xff]
        %v1478 = vld [vmem:[%s1457 + $0x147] sm:$0xff]
        %v1479 = vld [vmem:[%s1457 + $0x14f] sm:$0xff]
        %v1480 = vld [vmem:[%s1457 + $0x167] sm:$0xff]
        %v1481 = vld [vmem:[%s1457 + $0x16f] sm:$0xff]
        %v1482 = vld [vmem:[%s1457 + $0x187] sm:$0xff]
        %v1483 = vld [vmem:[%s1457 + $0x18f] sm:$0xff]
        %v1484 = vld [vmem:[%s1457 + $0x1a7] sm:$0xff]
        %v1485 = vld [vmem:[%s1457 + $0x1af] sm:$0xff]
        %v1486 = vld [vmem:[%s1457 + $0x1c7] sm:$0xff]
        %v1487 = vld [vmem:[%s1457 + $0x1cf] sm:$0xff]
        %v1488 = vld [vmem:[%s1457 + $0x1e7] sm:$0xff]
        %v1489 = vld [vmem:[%s1457 + $0x1ef] sm:$0xff]
        %v1490 = vld [vmem:[%s3 + $0x6] sm:$0x1]
        %v1491 = vperm.slane %v1490, 0
        %v1492 = vmul.f32 %v1458, %v1491
        %v1493 = vmul.f32 %v1459, %v1491
        %v1494 = vmul.f32 %v1460, %v1491
        %v1495 = vmul.f32 %v1461, %v1491
        %v1496 = vmul.f32 %v1462, %v1491
        %v1497 = vmul.f32 %v1463, %v1491
        %v1498 = vmul.f32 %v1464, %v1491
        %v1499 = vmul.f32 %v1465, %v1491
        %v1500 = vmul.f32 %v1466, %v1491
        %v1501 = vmul.f32 %v1467, %v1491
        %v1502 = vmul.f32 %v1468, %v1491
        %v1503 = vmul.f32 %v1469, %v1491
        %v1504 = vmul.f32 %v1470, %v1491
        %v1505 = vmul.f32 %v1471, %v1491
        %v1506 = vmul.f32 %v1472, %v1491
        %v1507 = vmul.f32 %v1473, %v1491
        %v1508 = vmul.f32 %v1474, %v1491
        %v1509 = vmul.f32 %v1475, %v1491
        %v1510 = vmul.f32 %v1476, %v1491
        %v1511 = vmul.f32 %v1477, %v1491
        %v1512 = vmul.f32 %v1478, %v1491
        %v1513 = vmul.f32 %v1479, %v1491
        %v1514 = vmul.f32 %v1480, %v1491
        %v1515 = vmul.f32 %v1481, %v1491
        %v1516 = vmul.f32 %v1482, %v1491
        %v1517 = vmul.f32 %v1483, %v1491
        %v1518 = vmul.f32 %v1484, %v1491
        %v1519 = vmul.f32 %v1485, %v1491
        %v1520 = vmul.f32 %v1486, %v1491
        %v1521 = vmul.f32 %v1487, %v1491
        %v1522 = vmul.f32 %v1488, %v1491
        %v1523 = vmul.f32 %v1489, %v1491
        %v1524 = vadd.f32 %v1425, %v1492
        %v1525 = vadd.f32 %v1426, %v1493
        %v1526 = vadd.f32 %v1427, %v1494
        %v1527 = vadd.f32 %v1428, %v1495
        %v1528 = vadd.f32 %v1429, %v1496
        %v1529 = vadd.f32 %v1430, %v1497
        %v1530 = vadd.f32 %v1431, %v1498
        %v1531 = vadd.f32 %v1432, %v1499
        %v1532 = vadd.f32 %v1433, %v1500
        %v1533 = vadd.f32 %v1434, %v1501
        %v1534 = vadd.f32 %v1435, %v1502
        %v1535 = vadd.f32 %v1436, %v1503
        %v1536 = vadd.f32 %v1437, %v1504
        %v1537 = vadd.f32 %v1438, %v1505
        %v1538 = vadd.f32 %v1439, %v1506
        %v1539 = vadd.f32 %v1440, %v1507
        %v1540 = vadd.f32 %v1441, %v1508
        %v1541 = vadd.f32 %v1442, %v1509
        %v1542 = vadd.f32 %v1443, %v1510
        %v1543 = vadd.f32 %v1444, %v1511
        %v1544 = vadd.f32 %v1445, %v1512
        %v1545 = vadd.f32 %v1446, %v1513
        %v1546 = vadd.f32 %v1447, %v1514
        %v1547 = vadd.f32 %v1448, %v1515
        %v1548 = vadd.f32 %v1449, %v1516
        %v1549 = vadd.f32 %v1450, %v1517
        %v1550 = vadd.f32 %v1451, %v1518
        %v1551 = vadd.f32 %v1452, %v1519
        %v1552 = vadd.f32 %v1453, %v1520
        %v1553 = vadd.f32 %v1454, %v1521
        %v1554 = vadd.f32 %v1455, %v1522
        %v1555 = vadd.f32 %v1456, %v1523
        %v1556 = vld [vmem:[%s1457 + $0x8] sm:$0xff]
        %v1557 = vld [vmem:[%s1457 + $0x10] sm:$0xff]
        %v1558 = vld [vmem:[%s1457 + $0x28] sm:$0xff]
        %v1559 = vld [vmem:[%s1457 + $0x30] sm:$0xff]
        %v1560 = vld [vmem:[%s1457 + $0x48] sm:$0xff]
        %v1561 = vld [vmem:[%s1457 + $0x50] sm:$0xff]
        %v1562 = vld [vmem:[%s1457 + $0x68] sm:$0xff]
        %v1563 = vld [vmem:[%s1457 + $0x70] sm:$0xff]
        %v1564 = vld [vmem:[%s1457 + $0x88] sm:$0xff]
        %v1565 = vld [vmem:[%s1457 + $0x90] sm:$0xff]
        %v1566 = vld [vmem:[%s1457 + $0xa8] sm:$0xff]
        %v1567 = vld [vmem:[%s1457 + $0xb0] sm:$0xff]
        %v1568 = vld [vmem:[%s1457 + $0xc8] sm:$0xff]
        %v1569 = vld [vmem:[%s1457 + $0xd0] sm:$0xff]
        %v1570 = vld [vmem:[%s1457 + $0xe8] sm:$0xff]
        %v1571 = vld [vmem:[%s1457 + $0xf0] sm:$0xff]
        %v1572 = vld [vmem:[%s1457 + $0x108] sm:$0xff]
        %v1573 = vld [vmem:[%s1457 + $0x110] sm:$0xff]
        %v1574 = vld [vmem:[%s1457 + $0x128] sm:$0xff]
        %v1575 = vld [vmem:[%s1457 + $0x130] sm:$0xff]
        %v1576 = vld [vmem:[%s1457 + $0x148] sm:$0xff]
        %v1577 = vld [vmem:[%s1457 + $0x150] sm:$0xff]
        %v1578 = vld [vmem:[%s1457 + $0x168] sm:$0xff]
        %v1579 = vld [vmem:[%s1457 + $0x170] sm:$0xff]
        %v1580 = vld [vmem:[%s1457 + $0x188] sm:$0xff]
        %v1581 = vld [vmem:[%s1457 + $0x190] sm:$0xff]
        %v1582 = vld [vmem:[%s1457 + $0x1a8] sm:$0xff]
        %v1583 = vld [vmem:[%s1457 + $0x1b0] sm:$0xff]
        %v1584 = vld [vmem:[%s1457 + $0x1c8] sm:$0xff]
        %v1585 = vld [vmem:[%s1457 + $0x1d0] sm:$0xff]
        %v1586 = vld [vmem:[%s1457 + $0x1e8] sm:$0xff]
        %v1587 = vld [vmem:[%s1457 + $0x1f0] sm:$0xff]
        %v1588 = vld [vmem:[%s3 + $0x7] sm:$0x1]
        %v1589 = vperm.slane %v1588, 0
        %v1590 = vmul.f32 %v1556, %v1589
        %v1591 = vmul.f32 %v1557, %v1589
        %v1592 = vmul.f32 %v1558, %v1589
        %v1593 = vmul.f32 %v1559, %v1589
        %v1594 = vmul.f32 %v1560, %v1589
        %v1595 = vmul.f32 %v1561, %v1589
        %v1596 = vmul.f32 %v1562, %v1589
        %v1597 = vmul.f32 %v1563, %v1589
        %v1598 = vmul.f32 %v1564, %v1589
        %v1599 = vmul.f32 %v1565, %v1589
        %v1600 = vmul.f32 %v1566, %v1589
        %v1601 = vmul.f32 %v1567, %v1589
        %v1602 = vmul.f32 %v1568, %v1589
        %v1603 = vmul.f32 %v1569, %v1589
        %v1604 = vmul.f32 %v1570, %v1589
        %v1605 = vmul.f32 %v1571, %v1589
        %v1606 = vmul.f32 %v1572, %v1589
        %v1607 = vmul.f32 %v1573, %v1589
        %v1608 = vmul.f32 %v1574, %v1589
        %v1609 = vmul.f32 %v1575, %v1589
        %v1610 = vmul.f32 %v1576, %v1589
        %v1611 = vmul.f32 %v1577, %v1589
        %v1612 = vmul.f32 %v1578, %v1589
        %v1613 = vmul.f32 %v1579, %v1589
        %v1614 = vmul.f32 %v1580, %v1589
        %v1615 = vmul.f32 %v1581, %v1589
        %v1616 = vmul.f32 %v1582, %v1589
        %v1617 = vmul.f32 %v1583, %v1589
        %v1618 = vmul.f32 %v1584, %v1589
        %v1619 = vmul.f32 %v1585, %v1589
        %v1620 = vmul.f32 %v1586, %v1589
        %v1621 = vmul.f32 %v1587, %v1589
        %v1622 = vadd.f32 %v1524, %v1590
        %v1623 = vadd.f32 %v1525, %v1591
        %v1624 = vadd.f32 %v1526, %v1592
        %v1625 = vadd.f32 %v1527, %v1593
        %v1626 = vadd.f32 %v1528, %v1594
        %v1627 = vadd.f32 %v1529, %v1595
        %v1628 = vadd.f32 %v1530, %v1596
        %v1629 = vadd.f32 %v1531, %v1597
        %v1630 = vadd.f32 %v1532, %v1598
        %v1631 = vadd.f32 %v1533, %v1599
        %v1632 = vadd.f32 %v1534, %v1600
        %v1633 = vadd.f32 %v1535, %v1601
        %v1634 = vadd.f32 %v1536, %v1602
        %v1635 = vadd.f32 %v1537, %v1603
        %v1636 = vadd.f32 %v1538, %v1604
        %v1637 = vadd.f32 %v1539, %v1605
        %v1638 = vadd.f32 %v1540, %v1606
        %v1639 = vadd.f32 %v1541, %v1607
        %v1640 = vadd.f32 %v1542, %v1608
        %v1641 = vadd.f32 %v1543, %v1609
        %v1642 = vadd.f32 %v1544, %v1610
        %v1643 = vadd.f32 %v1545, %v1611
        %v1644 = vadd.f32 %v1546, %v1612
        %v1645 = vadd.f32 %v1547, %v1613
        %v1646 = vadd.f32 %v1548, %v1614
        %v1647 = vadd.f32 %v1549, %v1615
        %v1648 = vadd.f32 %v1550, %v1616
        %v1649 = vadd.f32 %v1551, %v1617
        %v1650 = vadd.f32 %v1552, %v1618
        %v1651 = vadd.f32 %v1553, %v1619
        %v1652 = vadd.f32 %v1554, %v1620
        %v1653 = vadd.f32 %v1555, %v1621
        %v1654 = vld [vmem:[%s1457 + $0x9] sm:$0xff]
        %v1655 = vld [vmem:[%s1457 + $0x11] sm:$0xff]
        %v1656 = vld [vmem:[%s1457 + $0x29] sm:$0xff]
        %v1657 = vld [vmem:[%s1457 + $0x31] sm:$0xff]
        %v1658 = vld [vmem:[%s1457 + $0x49] sm:$0xff]
        %v1659 = vld [vmem:[%s1457 + $0x51] sm:$0xff]
        %v1660 = vld [vmem:[%s1457 + $0x69] sm:$0xff]
        %v1661 = vld [vmem:[%s1457 + $0x71] sm:$0xff]
        %v1662 = vld [vmem:[%s1457 + $0x89] sm:$0xff]
        %v1663 = vld [vmem:[%s1457 + $0x91] sm:$0xff]
        %v1664 = vld [vmem:[%s1457 + $0xa9] sm:$0xff]
        %v1665 = vld [vmem:[%s1457 + $0xb1] sm:$0xff]
        %v1666 = vld [vmem:[%s1457 + $0xc9] sm:$0xff]
        %v1667 = vld [vmem:[%s1457 + $0xd1] sm:$0xff]
        %v1668 = vld [vmem:[%s1457 + $0xe9] sm:$0xff]
        %v1669 = vld [vmem:[%s1457 + $0xf1] sm:$0xff]
        %v1670 = vld [vmem:[%s1457 + $0x109] sm:$0xff]
        %v1671 = vld [vmem:[%s1457 + $0x111] sm:$0xff]
        %v1672 = vld [vmem:[%s1457 + $0x129] sm:$0xff]
        %v1673 = vld [vmem:[%s1457 + $0x131] sm:$0xff]
        %v1674 = vld [vmem:[%s1457 + $0x149] sm:$0xff]
        %v1675 = vld [vmem:[%s1457 + $0x151] sm:$0xff]
        %v1676 = vld [vmem:[%s1457 + $0x169] sm:$0xff]
        %v1677 = vld [vmem:[%s1457 + $0x171] sm:$0xff]
        %v1678 = vld [vmem:[%s1457 + $0x189] sm:$0xff]
        %v1679 = vld [vmem:[%s1457 + $0x191] sm:$0xff]
        %v1680 = vld [vmem:[%s1457 + $0x1a9] sm:$0xff]
        %v1681 = vld [vmem:[%s1457 + $0x1b1] sm:$0xff]
        %v1682 = vld [vmem:[%s1457 + $0x1c9] sm:$0xff]
        %v1683 = vld [vmem:[%s1457 + $0x1d1] sm:$0xff]
        %v1684 = vld [vmem:[%s1457 + $0x1e9] sm:$0xff]
        %v1685 = vld [vmem:[%s1457 + $0x1f1] sm:$0xff]
        %v1686 = vld [vmem:[%s3 + $0x8] sm:$0x1]
        %v1687 = vperm.slane %v1686, 0
        %v1688 = vmul.f32 %v1654, %v1687
        %v1689 = vmul.f32 %v1655, %v1687
        %v1690 = vmul.f32 %v1656, %v1687
        %v1691 = vmul.f32 %v1657, %v1687
        %v1692 = vmul.f32 %v1658, %v1687
        %v1693 = vmul.f32 %v1659, %v1687
        %v1694 = vmul.f32 %v1660, %v1687
        %v1695 = vmul.f32 %v1661, %v1687
        %v1696 = vmul.f32 %v1662, %v1687
        %v1697 = vmul.f32 %v1663, %v1687
        %v1698 = vmul.f32 %v1664, %v1687
        %v1699 = vmul.f32 %v1665, %v1687
        %v1700 = vmul.f32 %v1666, %v1687
        %v1701 = vmul.f32 %v1667, %v1687
        %v1702 = vmul.f32 %v1668, %v1687
        %v1703 = vmul.f32 %v1669, %v1687
        %v1704 = vmul.f32 %v1670, %v1687
        %v1705 = vmul.f32 %v1671, %v1687
        %v1706 = vmul.f32 %v1672, %v1687
        %v1707 = vmul.f32 %v1673, %v1687
        %v1708 = vmul.f32 %v1674, %v1687
        %v1709 = vmul.f32 %v1675, %v1687
        %v1710 = vmul.f32 %v1676, %v1687
        %v1711 = vmul.f32 %v1677, %v1687
        %v1712 = vmul.f32 %v1678, %v1687
        %v1713 = vmul.f32 %v1679, %v1687
        %v1714 = vmul.f32 %v1680, %v1687
        %v1715 = vmul.f32 %v1681, %v1687
        %v1716 = vmul.f32 %v1682, %v1687
        %v1717 = vmul.f32 %v1683, %v1687
        %v1718 = vmul.f32 %v1684, %v1687
        %v1719 = vmul.f32 %v1685, %v1687
        %v1720 = vadd.f32 %v1622, %v1688
        %v1721 = vadd.f32 %v1623, %v1689
        %v1722 = vadd.f32 %v1624, %v1690
        %v1723 = vadd.f32 %v1625, %v1691
        %v1724 = vadd.f32 %v1626, %v1692
        %v1725 = vadd.f32 %v1627, %v1693
        %v1726 = vadd.f32 %v1628, %v1694
        %v1727 = vadd.f32 %v1629, %v1695
        %v1728 = vadd.f32 %v1630, %v1696
        %v1729 = vadd.f32 %v1631, %v1697
        %v1730 = vadd.f32 %v1632, %v1698
        %v1731 = vadd.f32 %v1633, %v1699
        %v1732 = vadd.f32 %v1634, %v1700
        %v1733 = vadd.f32 %v1635, %v1701
        %v1734 = vadd.f32 %v1636, %v1702
        %v1735 = vadd.f32 %v1637, %v1703
        %v1736 = vadd.f32 %v1638, %v1704
        %v1737 = vadd.f32 %v1639, %v1705
        %v1738 = vadd.f32 %v1640, %v1706
        %v1739 = vadd.f32 %v1641, %v1707
        %v1740 = vadd.f32 %v1642, %v1708
        %v1741 = vadd.f32 %v1643, %v1709
        %v1742 = vadd.f32 %v1644, %v1710
        %v1743 = vadd.f32 %v1645, %v1711
        %v1744 = vadd.f32 %v1646, %v1712
        %v1745 = vadd.f32 %v1647, %v1713
        %v1746 = vadd.f32 %v1648, %v1714
        %v1747 = vadd.f32 %v1649, %v1715
        %v1748 = vadd.f32 %v1650, %v1716
        %v1749 = vadd.f32 %v1651, %v1717
        %v1750 = vadd.f32 %v1652, %v1718
        %v1751 = vadd.f32 %v1653, %v1719
        %v1752 = vld [vmem:[%s4] sm:$0x1]
        %v1754 = vperm.slane %v1752, 0
        %v1756 = vadd.f32 %v1720, %v1754
        %v1757 = vadd.f32 %v1721, %v1754
        %v1758 = vadd.f32 %v1722, %v1754
        %v1759 = vadd.f32 %v1723, %v1754
        %v1760 = vadd.f32 %v1724, %v1754
        %v1761 = vadd.f32 %v1725, %v1754
        %v1762 = vadd.f32 %v1726, %v1754
        %v1763 = vadd.f32 %v1727, %v1754
        %v1764 = vadd.f32 %v1728, %v1754
        %v1765 = vadd.f32 %v1729, %v1754
        %v1766 = vadd.f32 %v1730, %v1754
        %v1767 = vadd.f32 %v1731, %v1754
        %v1768 = vadd.f32 %v1732, %v1754
        %v1769 = vadd.f32 %v1733, %v1754
        %v1770 = vadd.f32 %v1734, %v1754
        %v1771 = vadd.f32 %v1735, %v1754
        %v1772 = vadd.f32 %v1736, %v1754
        %v1773 = vadd.f32 %v1737, %v1754
        %v1774 = vadd.f32 %v1738, %v1754
        %v1775 = vadd.f32 %v1739, %v1754
        %v1776 = vadd.f32 %v1740, %v1754
        %v1777 = vadd.f32 %v1741, %v1754
        %v1778 = vadd.f32 %v1742, %v1754
        %v1779 = vadd.f32 %v1743, %v1754
        %v1780 = vadd.f32 %v1744, %v1754
        %v1781 = vadd.f32 %v1745, %v1754
        %v1782 = vadd.f32 %v1746, %v1754
        %v1783 = vadd.f32 %v1747, %v1754
        %v1784 = vadd.f32 %v1748, %v1754
        %v1785 = vadd.f32 %v1749, %v1754
        %v1786 = vadd.f32 %v1750, %v1754
        %v1787 = vadd.f32 %v1751, %v1754
        %v1788 = vadd.f32 %v1756, %v1757
        %v1789 = vadd.f32 %v1788, %v1758
        %v1790 = vadd.f32 %v1789, %v1759
        %v1791 = vadd.f32 %v1790, %v1760
        %v1792 = vadd.f32 %v1791, %v1761
        %v1793 = vadd.f32 %v1792, %v1762
        %v1794 = vadd.f32 %v1793, %v1763
        %v1795 = vadd.f32 %v1794, %v1764
        %v1796 = vadd.f32 %v1795, %v1765
        %v1797 = vadd.f32 %v1796, %v1766
        %v1798 = vadd.f32 %v1797, %v1767
        %v1799 = vadd.f32 %v1798, %v1768
        %v1800 = vadd.f32 %v1799, %v1769
        %v1801 = vadd.f32 %v1800, %v1770
        %v1802 = vadd.f32 %v1801, %v1771
        %v1803 = vadd.f32 %v1802, %v1772
        %v1804 = vadd.f32 %v1803, %v1773
        %v1805 = vadd.f32 %v1804, %v1774
        %v1806 = vadd.f32 %v1805, %v1775
        %v1807 = vadd.f32 %v1806, %v1776
        %v1808 = vadd.f32 %v1807, %v1777
        %v1809 = vadd.f32 %v1808, %v1778
        %v1810 = vadd.f32 %v1809, %v1779
        %v1811 = vadd.f32 %v1810, %v1780
        %v1812 = vadd.f32 %v1811, %v1781
        %v1813 = vadd.f32 %v1812, %v1782
        %v1814 = vadd.f32 %v1813, %v1783
        %v1815 = vadd.f32 %v1814, %v1784
        %v1816 = vadd.f32 %v1815, %v1785
        %v1817 = vadd.f32 %v1816, %v1786
        %v1818 = vadd.f32 %v1817, %v1787
        %v1819 = vrot.slane %v1818, 4
        %v1820 = vadd.f32 %v1818, %v1819
        %v1821 = vrot.slane %v1820, 2
        %v1822 = vadd.f32 %v1820, %v1821
        %v1823 = vrot.slane %v1822, 1
        %v1824 = vadd.f32 %v1822, %v1823
        %v1825 = vrcp.pop 256.0
        %v1826 = vmul.f32 256.0, %v1825
        %v1827 = vsub.f32 1.0, %v1826
        %v1828 = vmul.f32 %v1825, %v1827
        %v1829 = vadd.f32 %v1825, %v1828
        %vm1830 = vweird.f32 %v1825
        %v1831 = vsel %vm1830, %v1825, %v1829
        %v1832 = vmul.f32 %v1824, %v1831
        %v1833 = vpack.c.bf16 %v1832, %v1832
        %v1834 = vld [vmem:[%s5] sm:$0xf]
        %v1835 = vld [vmem:[%s5 + $0x4] sm:$0xf]
        %v1836 = vld [vmem:[%s5 + $0x8] sm:$0xf]
        %v1837 = vld [vmem:[%s5 + $0xc] sm:$0xf]
        %v1838 = vld [vmem:[%s5 + $0x10] sm:$0xf]
        %v1839 = vld [vmem:[%s5 + $0x14] sm:$0xf]
        %v1840 = vld [vmem:[%s5 + $0x18] sm:$0xf]
        %v1841 = vld [vmem:[%s5 + $0x1c] sm:$0xf]
        %v1842 = vld [vmem:[%s5 + $0x20] sm:$0xf]
        %v1843 = vld [vmem:[%s5 + $0x24] sm:$0xf]
        %v1844 = vld [vmem:[%s5 + $0x28] sm:$0xf]
        %v1845 = vld [vmem:[%s5 + $0x2c] sm:$0xf]
        %v1846 = vld [vmem:[%s5 + $0x30] sm:$0xf]
        %v1847 = vld [vmem:[%s5 + $0x34] sm:$0xf]
        %v1848 = vld [vmem:[%s5 + $0x38] sm:$0xf]
        %v1849 = vld [vmem:[%s5 + $0x3c] sm:$0xf]
        %v1850 = vld [vmem:[%s6] sm:$0x1]
        %v1852 = vperm.slane %v1850, 0
        %v1870 = vunpack.c.l.b16 %v1834
        %v1871 = vunpack.c.l.b16 %v1835
        %v1872 = vunpack.c.l.b16 %v1836
        %v1873 = vunpack.c.l.b16 %v1837
        %v1874 = vunpack.c.l.b16 %v1838
        %v1875 = vunpack.c.l.b16 %v1839
        %v1876 = vunpack.c.l.b16 %v1840
        %v1877 = vunpack.c.l.b16 %v1841
        %v1878 = vunpack.c.l.b16 %v1842
        %v1879 = vunpack.c.l.b16 %v1843
        %v1880 = vunpack.c.l.b16 %v1844
        %v1881 = vunpack.c.l.b16 %v1845
        %v1882 = vunpack.c.l.b16 %v1846
        %v1883 = vunpack.c.l.b16 %v1847
        %v1884 = vunpack.c.l.b16 %v1848
        %v1885 = vunpack.c.l.b16 %v1849
        %v1886 = vpack.c.b16 %v1871, %v1870
        %v1887 = vpack.c.b16 %v1873, %v1872
        %v1888 = vpack.c.b16 %v1875, %v1874
        %v1889 = vpack.c.b16 %v1877, %v1876
        %v1890 = vpack.c.b16 %v1879, %v1878
        %v1891 = vpack.c.b16 %v1881, %v1880
        %v1892 = vpack.c.b16 %v1883, %v1882
        %v1893 = vpack.c.b16 %v1885, %v1884
        %1902 = vmatpush.bf16.msra.mxu0 %v1893
        %1903 = vmatpush.bf16.msra.mxu0 %v1892
        %1904 = vmatpush.bf16.msra.mxu0 %v1891
        %1905 = vmatpush.bf16.msra.mxu0 %v1890
        %1906 = vmatpush.bf16.msra.mxu0 %v1889
        %1907 = vmatpush.bf16.msra.mxu0 %v1888
        %1908 = vmatpush.bf16.msra.mxu0 %v1887
        %1909 = vmatpush.bf16.msra.mxu0 %v1886
        %1910 = vmatmul.bf16.gmra.mxu0 %v1833
        %v1911 = vpop.f32.mrf.mxu0
        %v1912 = vadd.f32 %v1852, %v1911
        %v1913 = vpop.f32.mrf.mxu0
        %1914 = vdwg.mxu0
        %v1915 = vmax.f32 %v1912, 0.0
        %v1916 = vpack.c.bf16 %v1915, %v1915
        %v1917 = vld [vmem:[%s7] sm:$0xf]
        %v1918 = vld [vmem:[%s7 + $0x4] sm:$0xf]
        %v1919 = vld [vmem:[%s7 + $0x8] sm:$0xf]
        %v1920 = vld [vmem:[%s7 + $0xc] sm:$0xf]
        %v1921 = vld [vmem:[%s8] sm:$0x1]
        %v1923 = vperm.slane %v1921, 0
        %v1929 = vunpack.c.l.b16 %v1917
        %v1930 = vunpack.c.l.b16 %v1918
        %v1931 = vunpack.c.l.b16 %v1919
        %v1932 = vunpack.c.l.b16 %v1920
        %v1933 = vpack.c.b16 %v1930, %v1929
        %v1934 = vpack.c.b16 %v1932, %v1931
        %vm1937 = vcmask 261120
        %v1939 = vsel %vm1937, %v1916, 0
        %1941 = vmatpush.bf16.msra.mxu0 0
        %1942 = vmatpush.bf16.msra.mxu0 0
        %1943 = vmatpush.bf16.msra.mxu0 0
        %1944 = vmatpush.bf16.msra.mxu0 0
        %1945 = vmatpush.bf16.msra.mxu0 0
        %1946 = vmatpush.bf16.msra.mxu0 0
        %1947 = vmatpush.bf16.msra.mxu0 %v1934
        %1948 = vmatpush.bf16.msra.mxu0 %v1933
        %1949 = vmatmul.bf16.gmra.mxu0 %v1939
        %v1950 = vpop.f32.mrf.mxu0
        %v1951 = vadd.f32 %v1923, %v1950
        %v1952 = vpop.f32.mrf.mxu0
        %1953 = vdwg.mxu0
        %v1954 = vadd.f32 %v1951, 3.0
        %v1955 = vmax.f32 %v1954, 0.0
        %v1956 = vmin.f32 %v1955, 6.0
        %v1957 = vmul.f32 %v1956, 0.16666667
        %v1958 = vperm.slane %v1957, 0
        %v1959 = vmul.f32 %v1756, %v1958
        %v1960 = vmul.f32 %v1757, %v1958
        %v1961 = vmul.f32 %v1758, %v1958
        %v1962 = vmul.f32 %v1759, %v1958
        %v1963 = vmul.f32 %v1760, %v1958
        %v1964 = vmul.f32 %v1761, %v1958
        %v1965 = vmul.f32 %v1762, %v1958
        %v1966 = vmul.f32 %v1763, %v1958
        %v1967 = vmul.f32 %v1764, %v1958
        %v1968 = vmul.f32 %v1765, %v1958
        %v1969 = vmul.f32 %v1766, %v1958
        %v1970 = vmul.f32 %v1767, %v1958
        %v1971 = vmul.f32 %v1768, %v1958
        %v1972 = vmul.f32 %v1769, %v1958
        %v1973 = vmul.f32 %v1770, %v1958
        %v1974 = vmul.f32 %v1771, %v1958
        %v1975 = vmul.f32 %v1772, %v1958
        %v1976 = vmul.f32 %v1773, %v1958
        %v1977 = vmul.f32 %v1774, %v1958
        %v1978 = vmul.f32 %v1775, %v1958
        %v1979 = vmul.f32 %v1776, %v1958
        %v1980 = vmul.f32 %v1777, %v1958
        %v1981 = vmul.f32 %v1778, %v1958
        %v1982 = vmul.f32 %v1779, %v1958
        %v1983 = vmul.f32 %v1780, %v1958
        %v1984 = vmul.f32 %v1781, %v1958
        %v1985 = vmul.f32 %v1782, %v1958
        %v1986 = vmul.f32 %v1783, %v1958
        %v1987 = vmul.f32 %v1784, %v1958
        %v1988 = vmul.f32 %v1785, %v1958
        %v1989 = vmul.f32 %v1786, %v1958
        %v1990 = vmul.f32 %v1787, %v1958
        %v1991 = vadd.f32 %v1959, 3.0
        %v1992 = vadd.f32 %v1960, 3.0
        %v1993 = vadd.f32 %v1961, 3.0
        %v1994 = vadd.f32 %v1962, 3.0
        %v1995 = vadd.f32 %v1963, 3.0
        %v1996 = vadd.f32 %v1964, 3.0
        %v1997 = vadd.f32 %v1965, 3.0
        %v1998 = vadd.f32 %v1966, 3.0
        %v1999 = vadd.f32 %v1967, 3.0
        %v2000 = vadd.f32 %v1968, 3.0
        %v2001 = vadd.f32 %v1969, 3.0
        %v2002 = vadd.f32 %v1970, 3.0
        %v2003 = vadd.f32 %v1971, 3.0
        %v2004 = vadd.f32 %v1972, 3.0
        %v2005 = vadd.f32 %v1973, 3.0
        %v2006 = vadd.f32 %v1974, 3.0
        %v2007 = vadd.f32 %v1975, 3.0
        %v2008 = vadd.f32 %v1976, 3.0
        %v2009 = vadd.f32 %v1977, 3.0
        %v2010 = vadd.f32 %v1978, 3.0
        %v2011 = vadd.f32 %v1979, 3.0
        %v2012 = vadd.f32 %v1980, 3.0
        %v2013 = vadd.f32 %v1981, 3.0
        %v2014 = vadd.f32 %v1982, 3.0
        %v2015 = vadd.f32 %v1983, 3.0
        %v2016 = vadd.f32 %v1984, 3.0
        %v2017 = vadd.f32 %v1985, 3.0
        %v2018 = vadd.f32 %v1986, 3.0
        %v2019 = vadd.f32 %v1987, 3.0
        %v2020 = vadd.f32 %v1988, 3.0
        %v2021 = vadd.f32 %v1989, 3.0
        %v2022 = vadd.f32 %v1990, 3.0
        %v2023 = vmax.f32 %v1991, 0.0
        %v2024 = vmax.f32 %v1992, 0.0
        %v2025 = vmax.f32 %v1993, 0.0
        %v2026 = vmax.f32 %v1994, 0.0
        %v2027 = vmax.f32 %v1995, 0.0
        %v2028 = vmax.f32 %v1996, 0.0
        %v2029 = vmax.f32 %v1997, 0.0
        %v2030 = vmax.f32 %v1998, 0.0
        %v2031 = vmax.f32 %v1999, 0.0
        %v2032 = vmax.f32 %v2000, 0.0
        %v2033 = vmax.f32 %v2001, 0.0
        %v2034 = vmax.f32 %v2002, 0.0
        %v2035 = vmax.f32 %v2003, 0.0
        %v2036 = vmax.f32 %v2004, 0.0
        %v2037 = vmax.f32 %v2005, 0.0
        %v2038 = vmax.f32 %v2006, 0.0
        %v2039 = vmax.f32 %v2007, 0.0
        %v2040 = vmax.f32 %v2008, 0.0
        %v2041 = vmax.f32 %v2009, 0.0
        %v2042 = vmax.f32 %v2010, 0.0
        %v2043 = vmax.f32 %v2011, 0.0
        %v2044 = vmax.f32 %v2012, 0.0
        %v2045 = vmax.f32 %v2013, 0.0
        %v2046 = vmax.f32 %v2014, 0.0
        %v2047 = vmax.f32 %v2015, 0.0
        %v2048 = vmax.f32 %v2016, 0.0
        %v2049 = vmax.f32 %v2017, 0.0
        %v2050 = vmax.f32 %v2018, 0.0
        %v2051 = vmax.f32 %v2019, 0.0
        %v2052 = vmax.f32 %v2020, 0.0
        %v2053 = vmax.f32 %v2021, 0.0
        %v2054 = vmax.f32 %v2022, 0.0
        %v2055 = vmin.f32 %v2023, 6.0
        %v2056 = vmin.f32 %v2024, 6.0
        %v2057 = vmin.f32 %v2025, 6.0
        %v2058 = vmin.f32 %v2026, 6.0
        %v2059 = vmin.f32 %v2027, 6.0
        %v2060 = vmin.f32 %v2028, 6.0
        %v2061 = vmin.f32 %v2029, 6.0
        %v2062 = vmin.f32 %v2030, 6.0
        %v2063 = vmin.f32 %v2031, 6.0
        %v2064 = vmin.f32 %v2032, 6.0
        %v2065 = vmin.f32 %v2033, 6.0
        %v2066 = vmin.f32 %v2034, 6.0
        %v2067 = vmin.f32 %v2035, 6.0
        %v2068 = vmin.f32 %v2036, 6.0
        %v2069 = vmin.f32 %v2037, 6.0
        %v2070 = vmin.f32 %v2038, 6.0
        %v2071 = vmin.f32 %v2039, 6.0
        %v2072 = vmin.f32 %v2040, 6.0
        %v2073 = vmin.f32 %v2041, 6.0
        %v2074 = vmin.f32 %v2042, 6.0
        %v2075 = vmin.f32 %v2043, 6.0
        %v2076 = vmin.f32 %v2044, 6.0
        %v2077 = vmin.f32 %v2045, 6.0
        %v2078 = vmin.f32 %v2046, 6.0
        %v2079 = vmin.f32 %v2047, 6.0
        %v2080 = vmin.f32 %v2048, 6.0
        %v2081 = vmin.f32 %v2049, 6.0
        %v2082 = vmin.f32 %v2050, 6.0
        %v2083 = vmin.f32 %v2051, 6.0
        %v2084 = vmin.f32 %v2052, 6.0
        %v2085 = vmin.f32 %v2053, 6.0
        %v2086 = vmin.f32 %v2054, 6.0
        %v2087 = vmul.f32 %v2055, 0.16666667
        %v2088 = vmul.f32 %v2056, 0.16666667
        %v2089 = vmul.f32 %v2057, 0.16666667
        %v2090 = vmul.f32 %v2058, 0.16666667
        %v2091 = vmul.f32 %v2059, 0.16666667
        %v2092 = vmul.f32 %v2060, 0.16666667
        %v2093 = vmul.f32 %v2061, 0.16666667
        %v2094 = vmul.f32 %v2062, 0.16666667
        %v2095 = vmul.f32 %v2063, 0.16666667
        %v2096 = vmul.f32 %v2064, 0.16666667
        %v2097 = vmul.f32 %v2065, 0.16666667
        %v2098 = vmul.f32 %v2066, 0.16666667
        %v2099 = vmul.f32 %v2067, 0.16666667
        %v2100 = vmul.f32 %v2068, 0.16666667
        %v2101 = vmul.f32 %v2069, 0.16666667
        %v2102 = vmul.f32 %v2070, 0.16666667
        %v2103 = vmul.f32 %v2071, 0.16666667
        %v2104 = vmul.f32 %v2072, 0.16666667
        %v2105 = vmul.f32 %v2073, 0.16666667
        %v2106 = vmul.f32 %v2074, 0.16666667
        %v2107 = vmul.f32 %v2075, 0.16666667
        %v2108 = vmul.f32 %v2076, 0.16666667
        %v2109 = vmul.f32 %v2077, 0.16666667
        %v2110 = vmul.f32 %v2078, 0.16666667
        %v2111 = vmul.f32 %v2079, 0.16666667
        %v2112 = vmul.f32 %v2080, 0.16666667
        %v2113 = vmul.f32 %v2081, 0.16666667
        %v2114 = vmul.f32 %v2082, 0.16666667
        %v2115 = vmul.f32 %v2083, 0.16666667
        %v2116 = vmul.f32 %v2084, 0.16666667
        %v2117 = vmul.f32 %v2085, 0.16666667
        %v2118 = vmul.f32 %v2086, 0.16666667
        %v2119 = vmul.f32 %v1959, %v2087
        %v2120 = vmul.f32 %v1960, %v2088
        %v2121 = vmul.f32 %v1961, %v2089
        %v2122 = vmul.f32 %v1962, %v2090
        %v2123 = vmul.f32 %v1963, %v2091
        %v2124 = vmul.f32 %v1964, %v2092
        %v2125 = vmul.f32 %v1965, %v2093
        %v2126 = vmul.f32 %v1966, %v2094
        %v2127 = vmul.f32 %v1967, %v2095
        %v2128 = vmul.f32 %v1968, %v2096
        %v2129 = vmul.f32 %v1969, %v2097
        %v2130 = vmul.f32 %v1970, %v2098
        %v2131 = vmul.f32 %v1971, %v2099
        %v2132 = vmul.f32 %v1972, %v2100
        %v2133 = vmul.f32 %v1973, %v2101
        %v2134 = vmul.f32 %v1974, %v2102
        %v2135 = vmul.f32 %v1975, %v2103
        %v2136 = vmul.f32 %v1976, %v2104
        %v2137 = vmul.f32 %v1977, %v2105
        %v2138 = vmul.f32 %v1978, %v2106
        %v2139 = vmul.f32 %v1979, %v2107
        %v2140 = vmul.f32 %v1980, %v2108
        %v2141 = vmul.f32 %v1981, %v2109
        %v2142 = vmul.f32 %v1982, %v2110
        %v2143 = vmul.f32 %v1983, %v2111
        %v2144 = vmul.f32 %v1984, %v2112
        %v2145 = vmul.f32 %v1985, %v2113
        %v2146 = vmul.f32 %v1986, %v2114
        %v2147 = vmul.f32 %v1987, %v2115
        %v2148 = vmul.f32 %v1988, %v2116
        %v2149 = vmul.f32 %v1989, %v2117
        %v2150 = vmul.f32 %v1990, %v2118
        %v2151 = vld [vmem:[%s9] sm:$0xf]
        %v2152 = vld [vmem:[%s9 + $0x4] sm:$0xf]
        %v2153 = vld [vmem:[%s9 + $0x8] sm:$0xf]
        %v2154 = vld [vmem:[%s9 + $0xc] sm:$0xf]
        %v2155 = vld [vmem:[%s9 + $0x10] sm:$0xf]
        %v2156 = vld [vmem:[%s9 + $0x14] sm:$0xf]
        %v2157 = vld [vmem:[%s9 + $0x18] sm:$0xf]
        %v2158 = vld [vmem:[%s9 + $0x1c] sm:$0xf]
        %v2159 = vpack.c.bf16 %v2120, %v2119
        %v2160 = vpack.c.bf16 %v2122, %v2121
        %v2161 = vpack.c.bf16 %v2124, %v2123
        %v2162 = vpack.c.bf16 %v2126, %v2125
        %v2163 = vpack.c.bf16 %v2128, %v2127
        %v2164 = vpack.c.bf16 %v2130, %v2129
        %v2165 = vpack.c.bf16 %v2132, %v2131
        %v2166 = vpack.c.bf16 %v2134, %v2133
        %v2167 = vpack.c.bf16 %v2136, %v2135
        %v2168 = vpack.c.bf16 %v2138, %v2137
        %v2169 = vpack.c.bf16 %v2140, %v2139
        %v2170 = vpack.c.bf16 %v2142, %v2141
        %v2171 = vpack.c.bf16 %v2144, %v2143
        %v2172 = vpack.c.bf16 %v2146, %v2145
        %v2173 = vpack.c.bf16 %v2148, %v2147
        %v2174 = vpack.c.bf16 %v2150, %v2149
        %v2175 = vld [vmem:[%s10] sm:$0xff]
        %v2176 = vld [vmem:[%s10 + $0x8] sm:$0xff]
        %v2177 = vld [vmem:[%s10 + $0x10] sm:$0xff]
        %v2178 = vld [vmem:[%s10 + $0x18] sm:$0xff]
        %v2179 = vld [vmem:[%s10 + $0x20] sm:$0xff]
        %v2180 = vld [vmem:[%s10 + $0x28] sm:$0xff]
        %v2181 = vld [vmem:[%s10 + $0x30] sm:$0xff]
        %v2182 = vld [vmem:[%s10 + $0x38] sm:$0xff]
        %2184 = vset.pattern.permute.xlu0 0
        %2185 = vperm.xlu0 %2184, %v2175
        %v2186 = vpop.permute.xlu0 %2185
        %2189 = vset.pattern.permute.xlu0 0
        %2190 = vperm.xlu0 %2189, %v2176
        %v2191 = vpop.permute.xlu0 %2190
        %2194 = vset.pattern.permute.xlu0 0
        %2195 = vperm.xlu0 %2194, %v2177
        %v2196 = vpop.permute.xlu0 %2195
        %2199 = vset.pattern.permute.xlu0 0
        %2200 = vperm.xlu0 %2199, %v2178
        %v2201 = vpop.permute.xlu0 %2200
        %2204 = vset.pattern.permute.xlu0 0
        %2205 = vperm.xlu0 %2204, %v2179
        %v2206 = vpop.permute.xlu0 %2205
        %2209 = vset.pattern.permute.xlu0 0
        %2210 = vperm.xlu0 %2209, %v2180
        %v2211 = vpop.permute.xlu0 %2210
        %2214 = vset.pattern.permute.xlu0 0
        %2215 = vperm.xlu0 %2214, %v2181
        %v2216 = vpop.permute.xlu0 %2215
        %2219 = vset.pattern.permute.xlu0 0
        %2220 = vperm.xlu0 %2219, %v2182
        %v2221 = vpop.permute.xlu0 %2220
        %v2231 = vunpack.c.l.b16 %v2151
        %v2232 = vunpack.c.l.b16 %v2152
        %v2233 = vunpack.c.l.b16 %v2153
        %v2234 = vunpack.c.l.b16 %v2154
        %v2235 = vunpack.c.l.b16 %v2155
        %v2236 = vunpack.c.l.b16 %v2156
        %v2237 = vunpack.c.l.b16 %v2157
        %v2238 = vunpack.c.l.b16 %v2158
        %v2239 = vpack.c.b16 %v2232, %v2231
        %v2240 = vpack.c.b16 %v2234, %v2233
        %v2241 = vpack.c.b16 %v2236, %v2235
        %v2242 = vpack.c.b16 %v2238, %v2237
        %2247 = vmatpush.bf16.xpose.msra.mxu0 %v2166
        %2248 = vmatpush.bf16.xpose.msra.mxu0 %v2165
        %2249 = vmatpush.bf16.xpose.msra.mxu0 %v2164
        %2250 = vmatpush.bf16.xpose.msra.mxu0 %v2163
        %2251 = vmatpush.bf16.xpose.msra.mxu0 %v2162
        %2252 = vmatpush.bf16.xpose.msra.mxu0 %v2161
        %2253 = vmatpush.bf16.xpose.msra.mxu0 %v2160
        %2254 = vmatpush.bf16.xpose.msra.mxu0 %v2159
        %2255 = vmatmul.bf16.gmra.mxu0 %v2239
        %v2256 = vpop.f32.mrf.mxu0
        %v2257 = vadd.f32 %v2186, %v2256
        %v2258 = vpop.f32.mrf.mxu0
        %v2259 = vadd.f32 %v2191, %v2258
        %2260 = vmatmul.bf16.gmra.mxu0 %v2240
        %v2261 = vpop.f32.mrf.mxu0
        %v2262 = vadd.f32 %v2196, %v2261
        %v2263 = vpop.f32.mrf.mxu0
        %v2264 = vadd.f32 %v2201, %v2263
        %2265 = vmatmul.bf16.gmra.mxu0 %v2241
        %v2266 = vpop.f32.mrf.mxu0
        %v2267 = vadd.f32 %v2206, %v2266
        %v2268 = vpop.f32.mrf.mxu0
        %v2269 = vadd.f32 %v2211, %v2268
        %2270 = vmatmul.bf16.gmra.mxu0 %v2242
        %v2271 = vpop.f32.mrf.mxu0
        %v2272 = vadd.f32 %v2216, %v2271
        %v2273 = vpop.f32.mrf.mxu0
        %v2274 = vadd.f32 %v2221, %v2273
        %2275 = vdwg.mxu0
        %2276 = vmatpush.bf16.xpose.msra.mxu0 %v2174
        %2277 = vmatpush.bf16.xpose.msra.mxu0 %v2173
        %2278 = vmatpush.bf16.xpose.msra.mxu0 %v2172
        %2279 = vmatpush.bf16.xpose.msra.mxu0 %v2171
        %2280 = vmatpush.bf16.xpose.msra.mxu0 %v2170
        %2281 = vmatpush.bf16.xpose.msra.mxu0 %v2169
        %2282 = vmatpush.bf16.xpose.msra.mxu0 %v2168
        %2283 = vmatpush.bf16.xpose.msra.mxu0 %v2167
        %2284 = vmatmul.bf16.gmra.mxu0 %v2239
        %v2285 = vpop.f32.mrf.mxu0
        %v2286 = vadd.f32 %v2186, %v2285
        %v2287 = vpop.f32.mrf.mxu0
        %v2288 = vadd.f32 %v2191, %v2287
        %2289 = vmatmul.bf16.gmra.mxu0 %v2240
        %v2290 = vpop.f32.mrf.mxu0
        %v2291 = vadd.f32 %v2196, %v2290
        %v2292 = vpop.f32.mrf.mxu0
        %v2293 = vadd.f32 %v2201, %v2292
        %2294 = vmatmul.bf16.gmra.mxu0 %v2241
        %v2295 = vpop.f32.mrf.mxu0
        %v2296 = vadd.f32 %v2206, %v2295
        %v2297 = vpop.f32.mrf.mxu0
        %v2298 = vadd.f32 %v2211, %v2297
        %2299 = vmatmul.bf16.gmra.mxu0 %v2242
        %v2300 = vpop.f32.mrf.mxu0
        %v2301 = vadd.f32 %v2216, %v2300
        %v2302 = vpop.f32.mrf.mxu0
        %v2303 = vadd.f32 %v2221, %v2302
        %2304 = vdwg.mxu0
        %v2305 = vld [vmem:[%s11] sm:$0xf]
        %v2306 = vld [vmem:[%s11 + $0x4] sm:$0xf]
        %v2307 = vld [vmem:[%s11 + $0x8] sm:$0xf]
        %v2308 = vld [vmem:[%s11 + $0xc] sm:$0xf]
        %v2309 = vld [vmem:[%s11 + $0x10] sm:$0xf]
        %v2310 = vld [vmem:[%s11 + $0x14] sm:$0xf]
        %v2311 = vld [vmem:[%s11 + $0x18] sm:$0xf]
        %v2312 = vld [vmem:[%s11 + $0x1c] sm:$0xf]
        %v2321 = vunpack.c.l.b16 %v2305
        %v2322 = vunpack.c.l.b16 %v2306
        %v2323 = vunpack.c.l.b16 %v2307
        %v2324 = vunpack.c.l.b16 %v2308
        %v2325 = vunpack.c.l.b16 %v2309
        %v2326 = vunpack.c.l.b16 %v2310
        %v2327 = vunpack.c.l.b16 %v2311
        %v2328 = vunpack.c.l.b16 %v2312
        %v2329 = vpack.c.b16 %v2322, %v2321
        %v2330 = vpack.c.b16 %v2324, %v2323
        %v2331 = vpack.c.b16 %v2326, %v2325
        %v2332 = vpack.c.b16 %v2328, %v2327
        %v2334 = vsel %vm497, %v2329, 0
        %v2337 = vsel %vm497, %v2330, 0
        %v2340 = vsel %vm497, %v2331, 0
        %v2343 = vsel %vm497, %v2332, 0
        %2345 = vmatpush.bf16.xpose.msra.mxu0 %v520
        %2346 = vmatpush.bf16.xpose.msra.mxu0 %v517
        %2347 = vmatpush.bf16.xpose.msra.mxu0 %v514
        %2348 = vmatpush.bf16.xpose.msra.mxu0 %v511
        %2349 = vmatpush.bf16.xpose.msra.mxu0 %v508
        %2350 = vmatpush.bf16.xpose.msra.mxu0 %v505
        %2351 = vmatpush.bf16.xpose.msra.mxu0 %v502
        %2352 = vmatpush.bf16.xpose.msra.mxu0 %v499
        %2353 = vmatmul.bf16.gmra.mxu0 %v2334
        %v2354 = vpop.f32.mrf.mxu0
        %v2355 = vadd.f32 0.0, %v2354
        %v2356 = vpop.f32.mrf.mxu0
        %v2357 = vadd.f32 0.0, %v2356
        %2358 = vmatmul.bf16.gmra.mxu0 %v2337
        %v2359 = vpop.f32.mrf.mxu0
        %v2360 = vadd.f32 0.0, %v2359
        %v2361 = vpop.f32.mrf.mxu0
        %v2362 = vadd.f32 0.0, %v2361
        %2363 = vmatmul.bf16.gmra.mxu0 %v2340
        %v2364 = vpop.f32.mrf.mxu0
        %v2365 = vadd.f32 0.0, %v2364
        %v2366 = vpop.f32.mrf.mxu0
        %v2367 = vadd.f32 0.0, %v2366
        %2368 = vmatmul.bf16.gmra.mxu0 %v2343
        %v2369 = vpop.f32.mrf.mxu0
        %v2370 = vadd.f32 0.0, %v2369
        %v2371 = vpop.f32.mrf.mxu0
        %v2372 = vadd.f32 0.0, %v2371
        %2373 = vdwg.mxu0
        %2374 = vmatpush.bf16.xpose.msra.mxu0 %v544
        %2375 = vmatpush.bf16.xpose.msra.mxu0 %v541
        %2376 = vmatpush.bf16.xpose.msra.mxu0 %v538
        %2377 = vmatpush.bf16.xpose.msra.mxu0 %v535
        %2378 = vmatpush.bf16.xpose.msra.mxu0 %v532
        %2379 = vmatpush.bf16.xpose.msra.mxu0 %v529
        %2380 = vmatpush.bf16.xpose.msra.mxu0 %v526
        %2381 = vmatpush.bf16.xpose.msra.mxu0 %v523
        %2382 = vmatmul.bf16.gmra.mxu0 %v2334
        %v2383 = vpop.f32.mrf.mxu0
        %v2384 = vadd.f32 0.0, %v2383
        %v2385 = vpop.f32.mrf.mxu0
        %v2386 = vadd.f32 0.0, %v2385
        %2387 = vmatmul.bf16.gmra.mxu0 %v2337
        %v2388 = vpop.f32.mrf.mxu0
        %v2389 = vadd.f32 0.0, %v2388
        %v2390 = vpop.f32.mrf.mxu0
        %v2391 = vadd.f32 0.0, %v2390
        %2392 = vmatmul.bf16.gmra.mxu0 %v2340
        %v2393 = vpop.f32.mrf.mxu0
        %v2394 = vadd.f32 0.0, %v2393
        %v2395 = vpop.f32.mrf.mxu0
        %v2396 = vadd.f32 0.0, %v2395
        %2397 = vmatmul.bf16.gmra.mxu0 %v2343
        %v2398 = vpop.f32.mrf.mxu0
        %v2399 = vadd.f32 0.0, %v2398
        %v2400 = vpop.f32.mrf.mxu0
        %v2401 = vadd.f32 0.0, %v2400
        %2402 = vdwg.mxu0
        %v2403 = vadd.f32 %v2257, %v2355
        %v2404 = vadd.f32 %v2286, %v2384
        %v2405 = vadd.f32 %v2259, %v2357
        %v2406 = vadd.f32 %v2288, %v2386
        %v2407 = vadd.f32 %v2262, %v2360
        %v2408 = vadd.f32 %v2291, %v2389
        %v2409 = vadd.f32 %v2264, %v2362
        %v2410 = vadd.f32 %v2293, %v2391
        %v2411 = vadd.f32 %v2267, %v2365
        %v2412 = vadd.f32 %v2296, %v2394
        %v2413 = vadd.f32 %v2269, %v2367
        %v2414 = vadd.f32 %v2298, %v2396
        %v2415 = vadd.f32 %v2272, %v2370
        %v2416 = vadd.f32 %v2301, %v2399
        %v2417 = vadd.f32 %v2274, %v2372
        %v2418 = vadd.f32 %v2303, %v2401
        %2419 = vst [vmem:[%s406] sm:$0xff] %v2403
        %2420 = vst [vmem:[%s406 + $0x8] sm:$0xff] %v2404
        %2421 = vst [vmem:[%s406 + $0x10] sm:$0xff] %v2405
        %2422 = vst [vmem:[%s406 + $0x18] sm:$0xff] %v2406
        %2423 = vst [vmem:[%s406 + $0x20] sm:$0xff] %v2407
        %2424 = vst [vmem:[%s406 + $0x28] sm:$0xff] %v2408
        %2425 = vst [vmem:[%s406 + $0x30] sm:$0xff] %v2409
        %2426 = vst [vmem:[%s406 + $0x38] sm:$0xff] %v2410
        %2427 = vst [vmem:[%s406 + $0x40] sm:$0xff] %v2411
        %2428 = vst [vmem:[%s406 + $0x48] sm:$0xff] %v2412
        %2429 = vst [vmem:[%s406 + $0x50] sm:$0xff] %v2413
        %2430 = vst [vmem:[%s406 + $0x58] sm:$0xff] %v2414
        %2431 = vst [vmem:[%s406 + $0x60] sm:$0xff] %v2415
        %2432 = vst [vmem:[%s406 + $0x68] sm:$0xff] %v2416
        %2433 = vst [vmem:[%s406 + $0x70] sm:$0xff] %v2417
        %2434 = vst [vmem:[%s406 + $0x78] sm:$0xff] %v2418
        %s2435 = sand.u32 %s291, 1
        %s2436 = scalar_lea.sflag [#allocation4], %s2435
        %s2437 = sand.u32 %s291, 1
        %s2438 = smul.addr %s2437, 128
        %s2439 = scalar_lea.vmem [#allocation3], %s2438
        // Predicated region
        $region69: #{tpu_custom_call.1} parent=67 // pred_check
          %p2440 = pneg %p301
        $region70: #{tpu_custom_call.1} parent=67 // pred_check_branch
          %2442 = sbr.rel (%p2440) target = $region72
        $region71: #{tpu_custom_call.1} parent=67 // pred_region
          %2444 = vsyncadd %s2436, 0
          %s2445 = smul.addr %s26, 16
          %s2446 = smul.addr %s2445, 8
          %s2447 = scalar_lea.hbm %s12, %s2446
          %s2448 = sshll.u32 %s2439, 4
          %s2449 = int_to_ptr.vmem [resolvable:$true] %s2448
          %s2450 = sshll.u32 %s2447, 4
          %s2451 = int_to_ptr.hbm [resolvable:$true] %s2450
          %2456 = dma.vmem_to_hbm [thread:$0]  %s2449, 2048, %s2451, %s2436, 256, 256, 16
        $region72: #{tpu_custom_call.1} parent=67 // pred_fallthru
          _
      $region68: #{tpu_custom_call.1} parent=5 // pred_fallthru
        _
      %p2457 = scmp.le.s32.totalorder 2, %s21
      // Predicated region
      $region73: #{tpu_custom_call.1} parent=5 // pred_check
        %p2458 = pneg %p2457
      $region74: #{tpu_custom_call.1} parent=5 // pred_check_branch
        %2460 = sbr.rel (%p2458) target = $region76
      $region75: #{tpu_custom_call.1} parent=5 // pred_region
        %s2461 = ssub.s32 %s21, 2
        // Predicated region
        $region77: #{tpu_custom_call.1} parent=75 // pred_check
          %p2462 = pneg %p307
        $region78: #{tpu_custom_call.1} parent=75 // pred_check_branch
          %2464 = sbr.rel (%p2462) target = $region80
        $region79: #{tpu_custom_call.1} parent=75 // pred_region
          %s2465 = sand.u32 %s292, 1
          %s2466 = scalar_lea.sflag [#allocation4], %s2465
          %s2467 = sand.u32 %s292, 1
          %s2468 = smul.addr %s2467, 128
          %s2469 = scalar_lea.vmem [#allocation3], %s2468
          %2471 = dma.done %s2466, 2048
        $region80: #{tpu_custom_call.1} parent=75 // pred_fallthru
          _
      $region76: #{tpu_custom_call.1} parent=5 // pred_fallthru
        _
    $region6: #{tpu_custom_call.1} parent=1 // loop_footer
      %s25 = sadd.s32 1, %s21
    $region7: #{tpu_custom_call.1} parent=1 // loop_footer_branch
      %20 = sbr.rel target = $region3
    $region8: #{tpu_custom_call.1} parent=1 // loop_exit
      _
    %2472 = vsyncpa [#allocation4], 1
    %s2473 = scalar_lea.sflag [#allocation4], 1
    %2474 = vsyncpa %s2473, 1

</llo_original>
